<compile_context>
chip_gen: v7x
topology: tpu7x:2x2x1
jax: 0.10.0
libtpu: 0.0.40
codegen_flags: <defaults>
</compile_context>

<pallas_src>
import functools
import numpy as np
import jax
import jax.numpy as jnp
from jax.experimental import pallas as pl
from jax.experimental.pallas import tpu as pltpu


def _leaky_relu(x, slope=0.05):
    # torch.nn.LeakyReLU(0.05)
    return jnp.where(x >= 0, x, slope * x)


def gae_kernel(B, F_dim, H, L,
               x_ref, wadj_ref, wmats_ref, vcols_ref,
               rec_ref, out_ref, out2_ref):
    """Whole-batch GAE forward in the transposed, lane-dense (H, B*F) layout.

    x_ref     : (1, B*F)    flattened input row, b-major / f-minor
    wadj_ref  : (F, F)      (1 - I) * w  (computed in the wrapper, tiny)
    wmats_ref : (2L, H, H)  stacked W^T: encoder layers 1..L, then decoder 0..L-1
    vcols_ref : (H, 2L+4)   columns: enc W0^T, enc b0, enc b1..bL, dec b0..b(L-1),
                            dec W_L (H->1) column, dec b_L (replicated)
    rec_ref   : (1, B*F)    rec^T
    out_ref   : (H, B*F)    out^T  (encoder output)
    out2_ref  : (H, B*F)    out2^T (graph-mixed)
    """
    col = lambda i: vcols_ref[:, i:i + 1]                       # (H, 1)

    # ---- encoder MLP: (1, BF) -> (H, BF);  h^T = W^T @ prev + b ----
    x = x_ref[...]                                               # (1, BF)
    h = _leaky_relu(col(0) * x + col(1))                         # layer 0 (1->H): outer product
    for i in range(L):                                           # layers 1..L (H->H)
        h = jnp.dot(wmats_ref[i], h,
                    preferred_element_type=jnp.float32) + col(2 + i)
        if i < L - 1:                                            # no activation after out-layer
            h = _leaky_relu(h)
    out_ref[...] = h                                             # lane-dense store

    # ---- graph mixing: per-sample (H, F) @ (F, F); operand stays F x F ----
    wadj = wadj_ref[...]
    pieces = [
        jnp.dot(h[:, b * F_dim:(b + 1) * F_dim], wadj,
                preferred_element_type=jnp.float32)
        for b in range(B)
    ]
    h2 = pieces[0] if B == 1 else jnp.concatenate(pieces, axis=1)  # (H, BF)
    out2_ref[...] = h2                                           # lane-dense store

    # ---- decoder MLP: (H, BF) -> (1, BF) ----
    g = h2
    for i in range(L):                                           # layers 0..L-1 (H->H) + LeakyReLU
        g = _leaky_relu(
            jnp.dot(wmats_ref[L + i], g,
                    preferred_element_type=jnp.float32) + col(2 + L + i))
    wlast = col(2 + 2 * L)                                       # (H, 1) dec out-layer weight
    blast = vcols_ref[0:1, 2 * L + 3:2 * L + 4]                  # (1, 1) dec out-layer bias
    rec_ref[...] = jnp.sum(wlast * g, axis=0, keepdims=True) + blast


@jax.jit
def gae_forward(x, w, enc_params, dec_params):
    """x: (B, F) f32, w: (F, F), params: lists of (weight(in,out), bias(1,out))."""
    B, F_dim = x.shape
    H = enc_params[-1][0].shape[1]
    L = len(enc_params) - 1
    BF = B * F_dim

    # ---- tiny wrapper-side prep (no (BF,BF) kron anywhere) ----
    w_adj = (1.0 - jnp.eye(F_dim, dtype=w.dtype)) * w            # (F, F)
    x_row = x.reshape(1, BF)                                     # b-major, f-minor

    # Pack all MLP params into 2 buffers (fewer DMAs in the kernel prologue).
    mats = [wt.T for (wt, _) in enc_params[1:]] + [wt.T for (wt, _) in dec_params[:-1]]
    wmats = jnp.stack(mats, axis=0)                              # (2L, H, H)

    cols = [enc_params[0][0].reshape(H, 1),                      # enc W0^T  (1->H)
            enc_params[0][1].reshape(H, 1)]                      # enc b0
    cols += [b.reshape(H, 1) for (_, b) in enc_params[1:]]       # enc b1..bL
    cols += [b.reshape(H, 1) for (_, b) in dec_params[:-1]]      # dec b0..b(L-1)
    cols += [dec_params[-1][0].reshape(H, 1)]                    # dec W_L (H->1) column
    cols += [jnp.broadcast_to(dec_params[-1][1].reshape(1, 1), (H, 1))]  # dec b_L
    vcols = jnp.concatenate(cols, axis=1)                        # (H, 2L+4)

    # Advisory cost estimate (real FLOPs only; no structural zeros).
    flops = 2 * BF * H                                           # enc layer 0
    flops += 2 * L * (2 * H * H * BF)                            # 2L (H,H) MLP matmuls
    flops += 2 * H * F_dim * BF                                  # mixing: B * 2*H*F*F
    flops += 2 * H * BF                                          # dec out layer
    bytes_accessed = 4 * (BF + F_dim * F_dim + int(wmats.size) + int(vcols.size)
                          + BF + 2 * H * BF)
    cost = pl.CostEstimate(flops=int(flops), transcendentals=0,
                           bytes_accessed=int(bytes_accessed))

    vmem_spec = pl.BlockSpec(memory_space=pltpu.MemorySpace.VMEM)  # whole array, single buffer
    kernel = functools.partial(gae_kernel, B, F_dim, H, L)

    rec_t, out_t, out2_t = pl.pallas_call(
        kernel,
        out_shape=(jax.ShapeDtypeStruct((1, BF), jnp.float32),   # rec^T
                   jax.ShapeDtypeStruct((H, BF), jnp.float32),   # out^T
                   jax.ShapeDtypeStruct((H, BF), jnp.float32)),  # out2^T
        in_specs=[vmem_spec, vmem_spec, vmem_spec, vmem_spec],
        out_specs=(vmem_spec, vmem_spec, vmem_spec),
        cost_estimate=cost,
    )(x_row, w_adj, wmats, vcols)

    # Cheap layout ops back to the PyTorch output shapes (fused under jit).
    out = out_t.reshape(H, B, F_dim).transpose(1, 2, 0)          # (B, F, H)
    out2 = out2_t.reshape(H, B, F_dim).transpose(1, 2, 0)        # (B, F, H)
    rec = rec_t.reshape(1, B, F_dim).transpose(1, 2, 0)          # (B, F, 1)
    return rec, out, out2


# ---------------- deterministic parameter construction ----------------

def init_linear(key, fan_in, fan_out):
    kw, kb = jax.random.split(key)
    bound = 1.0 / float(np.sqrt(fan_in))            # matches nn.Linear default init
    wt = jax.random.uniform(kw, (fan_in, fan_out), jnp.float32, -bound, bound)
    bs = jax.random.uniform(kb, (1, fan_out), jnp.float32, -bound, bound)
    return wt, bs


def init_mlp(key, input_dim, layers, units, output_dim):
    dims_in = [input_dim] + [units] * (layers - 1) + [units]
    dims_out = [units] * layers + [output_dim]
    keys = jax.random.split(key, layers + 1)
    return [init_linear(k, di, do) for k, di, do in zip(keys, dims_in, dims_out)]


# ---------------- pure-JAX reference (for correctness check) ----------------

def ref_forward(x, w, enc, dec):
    B, F_dim = x.shape
    H = enc[-1][0].shape[1]
    h = x.reshape(B * F_dim, 1)
    for i, (wt, bs) in enumerate(enc):
        h = h @ wt + bs
        if i < len(enc) - 1:
            h = jnp.where(h >= 0, h, 0.05 * h)
    out = h.reshape(B, F_dim, H)
    w_adj = (1.0 - jnp.eye(F_dim, dtype=w.dtype)) * w
    out2 = jnp.einsum('ijk,jl->ilk', out, w_adj)
    h2 = out2.reshape(B * F_dim, H)
    for i, (wt, bs) in enumerate(dec):
        h2 = h2 @ wt + bs
        if i < len(dec) - 1:
            h2 = jnp.where(h2 >= 0, h2, 0.05 * h2)
    rec = h2.reshape(B, F_dim, 1)
    return rec, out, out2


if __name__ == "__main__":
    # option_list-equivalent (small synthetic shapes): B*F = 128 -> lane-dense slabs.
    B, F_DIM, H, L = 8, 16, 32, 2          # batch, feature_num, hidden_dim, hidden_layers

    key = jax.random.PRNGKey(0)
    kx, kw, ke, kd = jax.random.split(key, 4)
    x = jax.random.normal(kx, (B, F_DIM), jnp.float32)
    w = jax.random.uniform(kw, (F_DIM, F_DIM), jnp.float32, -0.1, 0.1)  # nn.init.uniform_(-0.1, 0.1)
    enc_params = init_mlp(ke, 1, L, H, H)       # MLP(1 -> H ... -> H)
    dec_params = init_mlp(kd, H, L, H, 1)       # MLP(H -> H ... -> 1)

    rec, out, out2 = gae_forward(x, w, enc_params, dec_params)
    jax.block_until_ready((rec, out, out2))

    # Tolerance covers TPU default-matmul-precision differences between the
    # kernel's dots and the XLA reference (values are O(1), f32 end-to-end).
    r_ref, o_ref, o2_ref = ref_forward(x, w, enc_params, dec_params)
    assert np.allclose(np.asarray(out),  np.asarray(o_ref),  rtol=1e-2, atol=1e-2)
    assert np.allclose(np.asarray(out2), np.asarray(o2_ref), rtol=1e-2, atol=1e-2)
    assert np.allclose(np.asarray(rec),  np.asarray(r_ref),  rtol=1e-2, atol=1e-2)
    print("KERNEL_OK")
</pallas_src>

<mosaic_0001>
module attributes {stable_mosaic.version = 11 : i64} {
  func.func @gae_kernel(%arg0: memref<1x128xf32, #tpu.memory_space<vmem>>, %arg1: memref<16x16xf32, #tpu.memory_space<vmem>>, %arg2: memref<4x32x32xf32, #tpu.memory_space<vmem>>, %arg3: memref<32x8xf32, #tpu.memory_space<vmem>>, %arg4: memref<1x128xf32, #tpu.memory_space<vmem>>, %arg5: memref<32x128xf32, #tpu.memory_space<vmem>>, %arg6: memref<32x128xf32, #tpu.memory_space<vmem>>) attributes {dimension_semantics = [], scalar_prefetch = 0 : i64, scratch_operands = 0 : i64, tpu.core_type = #tpu.core_type<tc>} {
    %c0 = arith.constant 0 : index
    %c0_0 = arith.constant 0 : index
    %0 = vector.load %arg0[%c0, %c0_0] : memref<1x128xf32, #tpu.memory_space<vmem>>, vector<1x128xf32>
    %c0_1 = arith.constant 0 : index
    %c0_2 = arith.constant 0 : index
    %1 = vector.load %arg3[%c0_1, %c0_2] : memref<32x8xf32, #tpu.memory_space<vmem>>, vector<32x1xf32>
    %2 = vector.broadcast %1 : vector<32x1xf32> to vector<32x128xf32>
    %3 = vector.broadcast %0 : vector<1x128xf32> to vector<32x128xf32>
    %4 = arith.mulf %2, %3 : vector<32x128xf32>
    %c0_3 = arith.constant 0 : index
    %c1 = arith.constant 1 : index
    %5 = vector.load %arg3[%c0_3, %c1] : memref<32x8xf32, #tpu.memory_space<vmem>>, vector<32x1xf32>
    %6 = vector.broadcast %5 : vector<32x1xf32> to vector<32x128xf32>
    %7 = arith.addf %4, %6 : vector<32x128xf32>
    %cst = arith.constant 0.000000e+00 : f32
    %8 = vector.broadcast %cst : f32 to vector<32x128xf32>
    %9 = arith.cmpf oge, %7, %8 : vector<32x128xf32>
    %cst_4 = arith.constant 5.000000e-02 : f32
    %10 = vector.broadcast %cst_4 : f32 to vector<32x128xf32>
    %11 = arith.mulf %10, %7 : vector<32x128xf32>
    %12 = arith.select %9, %7, %11 : vector<32x128xi1>, vector<32x128xf32>
    %c0_5 = arith.constant 0 : index
    %c0_6 = arith.constant 0 : index
    %c0_7 = arith.constant 0 : index
    %13 = vector.load %arg2[%c0_5, %c0_6, %c0_7] : memref<4x32x32xf32, #tpu.memory_space<vmem>>, vector<1x32x32xf32>
    %14 = vector.shape_cast %13 : vector<1x32x32xf32> to vector<32x32xf32>
    %cst_8 = arith.constant dense<0.000000e+00> : vector<32x128xf32>
    %15 = tpu.matmul %14, %12, %cst_8 {dimension_numbers = #tpu.dot_dimension_numbers<[1], [0], [0], [1], [0, 0, 1, 1], [], []>} : vector<32x32xf32>, vector<32x128xf32>, vector<32x128xf32> -> vector<32x128xf32>
    %c0_9 = arith.constant 0 : index
    %c2 = arith.constant 2 : index
    %16 = vector.load %arg3[%c0_9, %c2] : memref<32x8xf32, #tpu.memory_space<vmem>>, vector<32x1xf32>
    %17 = vector.broadcast %16 : vector<32x1xf32> to vector<32x128xf32>
    %18 = arith.addf %15, %17 : vector<32x128xf32>
    %cst_10 = arith.constant 0.000000e+00 : f32
    %19 = vector.broadcast %cst_10 : f32 to vector<32x128xf32>
    %20 = arith.cmpf oge, %18, %19 : vector<32x128xf32>
    %cst_11 = arith.constant 5.000000e-02 : f32
    %21 = vector.broadcast %cst_11 : f32 to vector<32x128xf32>
    %22 = arith.mulf %21, %18 : vector<32x128xf32>
    %23 = arith.select %20, %18, %22 : vector<32x128xi1>, vector<32x128xf32>
    %c1_12 = arith.constant 1 : index
    %c0_13 = arith.constant 0 : index
    %c0_14 = arith.constant 0 : index
    %24 = vector.load %arg2[%c1_12, %c0_13, %c0_14] : memref<4x32x32xf32, #tpu.memory_space<vmem>>, vector<1x32x32xf32>
    %25 = vector.shape_cast %24 : vector<1x32x32xf32> to vector<32x32xf32>
    %cst_15 = arith.constant dense<0.000000e+00> : vector<32x128xf32>
    %26 = tpu.matmul %25, %23, %cst_15 {dimension_numbers = #tpu.dot_dimension_numbers<[1], [0], [0], [1], [0, 0, 1, 1], [], []>} : vector<32x32xf32>, vector<32x128xf32>, vector<32x128xf32> -> vector<32x128xf32>
    %c0_16 = arith.constant 0 : index
    %c3 = arith.constant 3 : index
    %27 = vector.load %arg3[%c0_16, %c3] : memref<32x8xf32, #tpu.memory_space<vmem>>, vector<32x1xf32>
    %28 = vector.broadcast %27 : vector<32x1xf32> to vector<32x128xf32>
    %29 = arith.addf %26, %28 : vector<32x128xf32>
    %c0_17 = arith.constant 0 : index
    %c0_18 = arith.constant 0 : index
    %30 = vector.load %arg5[%c0_17, %c0_18] : memref<32x128xf32, #tpu.memory_space<vmem>>, vector<32x128xf32>
    tpu.vector_store %arg5[%c0_17, %c0_18], %29 {strides = array<i32>} : memref<32x128xf32, #tpu.memory_space<vmem>>, vector<32x128xf32>,
    %c0_19 = arith.constant 0 : index
    %c0_20 = arith.constant 0 : index
    %31 = vector.load %arg1[%c0_19, %c0_20] : memref<16x16xf32, #tpu.memory_space<vmem>>, vector<16x16xf32>
    %32 = vector.extract_strided_slice %29 {offsets = [0, 0], sizes = [32, 16], strides = [1, 1]} : vector<32x128xf32> to vector<32x16xf32>
    %cst_21 = arith.constant dense<0.000000e+00> : vector<32x16xf32>
    %33 = tpu.matmul %32, %31, %cst_21 {dimension_numbers = #tpu.dot_dimension_numbers<[1], [0], [0], [1], [0, 0, 1, 1], [], []>} : vector<32x16xf32>, vector<16x16xf32>, vector<32x16xf32> -> vector<32x16xf32>
    %34 = vector.extract_strided_slice %29 {offsets = [0, 16], sizes = [32, 16], strides = [1, 1]} : vector<32x128xf32> to vector<32x16xf32>
    %cst_22 = arith.constant dense<0.000000e+00> : vector<32x16xf32>
    %35 = tpu.matmul %34, %31, %cst_22 {dimension_numbers = #tpu.dot_dimension_numbers<[1], [0], [0], [1], [0, 0, 1, 1], [], []>} : vector<32x16xf32>, vector<16x16xf32>, vector<32x16xf32> -> vector<32x16xf32>
    %36 = vector.extract_strided_slice %29 {offsets = [0, 32], sizes = [32, 16], strides = [1, 1]} : vector<32x128xf32> to vector<32x16xf32>
    %cst_23 = arith.constant dense<0.000000e+00> : vector<32x16xf32>
    %37 = tpu.matmul %36, %31, %cst_23 {dimension_numbers = #tpu.dot_dimension_numbers<[1], [0], [0], [1], [0, 0, 1, 1], [], []>} : vector<32x16xf32>, vector<16x16xf32>, vector<32x16xf32> -> vector<32x16xf32>
    %38 = vector.extract_strided_slice %29 {offsets = [0, 48], sizes = [32, 16], strides = [1, 1]} : vector<32x128xf32> to vector<32x16xf32>
    %cst_24 = arith.constant dense<0.000000e+00> : vector<32x16xf32>
    %39 = tpu.matmul %38, %31, %cst_24 {dimension_numbers = #tpu.dot_dimension_numbers<[1], [0], [0], [1], [0, 0, 1, 1], [], []>} : vector<32x16xf32>, vector<16x16xf32>, vector<32x16xf32> -> vector<32x16xf32>
    %40 = vector.extract_strided_slice %29 {offsets = [0, 64], sizes = [32, 16], strides = [1, 1]} : vector<32x128xf32> to vector<32x16xf32>
    %cst_25 = arith.constant dense<0.000000e+00> : vector<32x16xf32>
    %41 = tpu.matmul %40, %31, %cst_25 {dimension_numbers = #tpu.dot_dimension_numbers<[1], [0], [0], [1], [0, 0, 1, 1], [], []>} : vector<32x16xf32>, vector<16x16xf32>, vector<32x16xf32> -> vector<32x16xf32>
    %42 = vector.extract_strided_slice %29 {offsets = [0, 80], sizes = [32, 16], strides = [1, 1]} : vector<32x128xf32> to vector<32x16xf32>
    %cst_26 = arith.constant dense<0.000000e+00> : vector<32x16xf32>
    %43 = tpu.matmul %42, %31, %cst_26 {dimension_numbers = #tpu.dot_dimension_numbers<[1], [0], [0], [1], [0, 0, 1, 1], [], []>} : vector<32x16xf32>, vector<16x16xf32>, vector<32x16xf32> -> vector<32x16xf32>
    %44 = vector.extract_strided_slice %29 {offsets = [0, 96], sizes = [32, 16], strides = [1, 1]} : vector<32x128xf32> to vector<32x16xf32>
    %cst_27 = arith.constant dense<0.000000e+00> : vector<32x16xf32>
    %45 = tpu.matmul %44, %31, %cst_27 {dimension_numbers = #tpu.dot_dimension_numbers<[1], [0], [0], [1], [0, 0, 1, 1], [], []>} : vector<32x16xf32>, vector<16x16xf32>, vector<32x16xf32> -> vector<32x16xf32>
    %46 = vector.extract_strided_slice %29 {offsets = [0, 112], sizes = [32, 16], strides = [1, 1]} : vector<32x128xf32> to vector<32x16xf32>
    %cst_28 = arith.constant dense<0.000000e+00> : vector<32x16xf32>
    %47 = tpu.matmul %46, %31, %cst_28 {dimension_numbers = #tpu.dot_dimension_numbers<[1], [0], [0], [1], [0, 0, 1, 1], [], []>} : vector<32x16xf32>, vector<16x16xf32>, vector<32x16xf32> -> vector<32x16xf32>
    %48 = tpu.concatenate %33, %35, %37, %39, %41, %43, %45, %47 in 1 : vector<32x16xf32>, vector<32x16xf32>, vector<32x16xf32>, vector<32x16xf32>, vector<32x16xf32>, vector<32x16xf32>, vector<32x16xf32>, vector<32x16xf32> -> vector<32x128xf32>
    %c0_29 = arith.constant 0 : index
    %c0_30 = arith.constant 0 : index
    %49 = vector.load %arg6[%c0_29, %c0_30] : memref<32x128xf32, #tpu.memory_space<vmem>>, vector<32x128xf32>
    tpu.vector_store %arg6[%c0_29, %c0_30], %48 {strides = array<i32>} : memref<32x128xf32, #tpu.memory_space<vmem>>, vector<32x128xf32>,
    %c2_31 = arith.constant 2 : index
    %c0_32 = arith.constant 0 : index
    %c0_33 = arith.constant 0 : index
    %50 = vector.load %arg2[%c2_31, %c0_32, %c0_33] : memref<4x32x32xf32, #tpu.memory_space<vmem>>, vector<1x32x32xf32>
    %51 = vector.shape_cast %50 : vector<1x32x32xf32> to vector<32x32xf32>
    %cst_34 = arith.constant dense<0.000000e+00> : vector<32x128xf32>
    %52 = tpu.matmul %51, %48, %cst_34 {dimension_numbers = #tpu.dot_dimension_numbers<[1], [0], [0], [1], [0, 0, 1, 1], [], []>} : vector<32x32xf32>, vector<32x128xf32>, vector<32x128xf32> -> vector<32x128xf32>
    %c0_35 = arith.constant 0 : index
    %c4 = arith.constant 4 : index
    %53 = vector.load %arg3[%c0_35, %c4] : memref<32x8xf32, #tpu.memory_space<vmem>>, vector<32x1xf32>
    %54 = vector.broadcast %53 : vector<32x1xf32> to vector<32x128xf32>
    %55 = arith.addf %52, %54 : vector<32x128xf32>
    %cst_36 = arith.constant 0.000000e+00 : f32
    %56 = vector.broadcast %cst_36 : f32 to vector<32x128xf32>
    %57 = arith.cmpf oge, %55, %56 : vector<32x128xf32>
    %cst_37 = arith.constant 5.000000e-02 : f32
    %58 = vector.broadcast %cst_37 : f32 to vector<32x128xf32>
    %59 = arith.mulf %58, %55 : vector<32x128xf32>
    %60 = arith.select %57, %55, %59 : vector<32x128xi1>, vector<32x128xf32>
    %c3_38 = arith.constant 3 : index
    %c0_39 = arith.constant 0 : index
    %c0_40 = arith.constant 0 : index
    %61 = vector.load %arg2[%c3_38, %c0_39, %c0_40] : memref<4x32x32xf32, #tpu.memory_space<vmem>>, vector<1x32x32xf32>
    %62 = vector.shape_cast %61 : vector<1x32x32xf32> to vector<32x32xf32>
    %cst_41 = arith.constant dense<0.000000e+00> : vector<32x128xf32>
    %63 = tpu.matmul %62, %60, %cst_41 {dimension_numbers = #tpu.dot_dimension_numbers<[1], [0], [0], [1], [0, 0, 1, 1], [], []>} : vector<32x32xf32>, vector<32x128xf32>, vector<32x128xf32> -> vector<32x128xf32>
    %c0_42 = arith.constant 0 : index
    %c5 = arith.constant 5 : index
    %64 = vector.load %arg3[%c0_42, %c5] : memref<32x8xf32, #tpu.memory_space<vmem>>, vector<32x1xf32>
    %65 = vector.broadcast %64 : vector<32x1xf32> to vector<32x128xf32>
    %66 = arith.addf %63, %65 : vector<32x128xf32>
    %cst_43 = arith.constant 0.000000e+00 : f32
    %67 = vector.broadcast %cst_43 : f32 to vector<32x128xf32>
    %68 = arith.cmpf oge, %66, %67 : vector<32x128xf32>
    %cst_44 = arith.constant 5.000000e-02 : f32
    %69 = vector.broadcast %cst_44 : f32 to vector<32x128xf32>
    %70 = arith.mulf %69, %66 : vector<32x128xf32>
    %71 = arith.select %68, %66, %70 : vector<32x128xi1>, vector<32x128xf32>
    %c0_45 = arith.constant 0 : index
    %c6 = arith.constant 6 : index
    %72 = vector.load %arg3[%c0_45, %c6] : memref<32x8xf32, #tpu.memory_space<vmem>>, vector<32x1xf32>
    %c0_46 = arith.constant 0 : index
    %c7 = arith.constant 7 : index
    %73 = vector.load %arg3[%c0_46, %c7] : memref<32x8xf32, #tpu.memory_space<vmem>>, vector<1x1xf32>
    %74 = vector.broadcast %72 : vector<32x1xf32> to vector<32x128xf32>
    %75 = arith.mulf %74, %71 : vector<32x128xf32>
    %cst_47 = arith.constant dense<0.000000e+00> : vector<128xf32>
    %76 = vector.multi_reduction <add>, %75, %cst_47 [0] : vector<32x128xf32> to vector<128xf32>
    %77 = vector.shape_cast %76 : vector<128xf32> to vector<1x128xf32>
    %78 = vector.broadcast %73 : vector<1x1xf32> to vector<1x128xf32>
    %79 = arith.addf %77, %78 : vector<1x128xf32>
    %c0_48 = arith.constant 0 : index
    %c0_49 = arith.constant 0 : index
    %80 = vector.load %arg4[%c0_48, %c0_49] : memref<1x128xf32, #tpu.memory_space<vmem>>, vector<1x128xf32>
    tpu.vector_store %arg4[%c0_48, %c0_49], %79 {strides = array<i32>} : memref<1x128xf32, #tpu.memory_space<vmem>>, vector<1x128xf32>,
    return
  }
}

</mosaic_0001>

<llo_original>
// kernel: gae_forward.1
$region0: #{gae_forward.1}
  #allocation0 [shape = 'u32[]', space=smem, size = 0x4, offset = 0x4, fixed_abs, tag = 'smem constant byte address 0x4 - core index']
  #allocation1 [shape = 'u32[144,128]{1,0:T(1,128)}', space=vmem, size = 0x12000, scoped, tag = 'internal scratch']
  %s0 = inlined_call_operand.vmem [shape: f32[1,128], index: 0, kind: input, shape index: {}]
  %s1 = inlined_call_operand.vmem [shape: f32[16,16], index: 1, kind: input, shape index: {}]
  %s2 = inlined_call_operand.vmem [shape: f32[4,32,32], index: 2, kind: input, shape index: {}]
  %s3 = inlined_call_operand.vmem [shape: f32[32,8], index: 3, kind: input, shape index: {}]
  %s4 = inlined_call_operand.vmem [shape: f32[1,128], index: 4, kind: output, shape index: {0}]
  %s5 = inlined_call_operand.vmem [shape: f32[32,128], index: 5, kind: output, shape index: {1}]
  %s6 = inlined_call_operand.vmem [shape: f32[32,128], index: 6, kind: output, shape index: {2}]
  %7 = xla_tuple %s4, %s5, %s6
  %s8 = sld [smem:[#allocation0]]
  $region42: #{gae_forward.1} parent=0
    _
  %s10 = ssub.s32 1, %s8
  %s11 = scalar_select 0, %s10, %s8
  // Predicated region
  $region2: #{gae_forward.1} parent=0 // pred_check
    _
  $region3: #{gae_forward.1} parent=0 // pred_check_branch
    %13 = sbr.rel (0) target = $region5
  $region4: #{gae_forward.1} parent=0 // pred_region
    _
  $region5: #{gae_forward.1} parent=0 // pred_fallthru
    _
  // Predicated region
  $region6: #{gae_forward.1} parent=0 // pred_check
    _
  $region7: #{gae_forward.1} parent=0 // pred_check_branch
    %15 = sbr.rel (0) target = $region9
  $region8: #{gae_forward.1} parent=0 // pred_region
    _
  $region9: #{gae_forward.1} parent=0 // pred_fallthru
    _
  // Predicated region
  $region10: #{gae_forward.1} parent=0 // pred_check
    _
  $region11: #{gae_forward.1} parent=0 // pred_check_branch
    %17 = sbr.rel (0) target = $region13
  $region12: #{gae_forward.1} parent=0 // pred_region
    _
  $region13: #{gae_forward.1} parent=0 // pred_fallthru
    _
  // Predicated region
  $region14: #{gae_forward.1} parent=0 // pred_check
    _
  $region15: #{gae_forward.1} parent=0 // pred_check_branch
    %19 = sbr.rel (0) target = $region17
  $region16: #{gae_forward.1} parent=0 // pred_region
    _
  $region17: #{gae_forward.1} parent=0 // pred_fallthru
    _
  %v20 = vld [vmem:[%s0] sm:$0x1]
  %v21 = vld [vmem:[%s3] sm:$0xff]
  %v22 = vld [vmem:[%s3 + $0x8] sm:$0xff]
  %v23 = vld [vmem:[%s3 + $0x10] sm:$0xff]
  %v24 = vld [vmem:[%s3 + $0x18] sm:$0xff]
  %26 = vset.pattern.permute.xlu0 0
  %27 = vperm.xlu0 %26, %v21
  %v28 = vpop.permute.xlu0 %27
  %31 = vset.pattern.permute.xlu0 0
  %32 = vperm.xlu0 %31, %v22
  %v33 = vpop.permute.xlu0 %32
  %36 = vset.pattern.permute.xlu0 0
  %37 = vperm.xlu0 %36, %v23
  %v38 = vpop.permute.xlu0 %37
  %41 = vset.pattern.permute.xlu0 0
  %42 = vperm.xlu0 %41, %v24
  %v43 = vpop.permute.xlu0 %42
  %v46 = vlaneseq
  %v47 = vshrl.u32 %v46, 7
  %v48 = vsub.s32 0, %v47
  %v49 = vrot.slane %v20, %v48
  %v51 = vmul.f32 %v28, %v49
  %v52 = vmul.f32 %v33, %v49
  %v53 = vmul.f32 %v38, %v49
  %v54 = vmul.f32 %v43, %v49
  %55 = vset.pattern.permute.xlu0 1
  %56 = vperm.xlu0 %55, %v21
  %v57 = vpop.permute.xlu0 %56
  %59 = vset.pattern.permute.xlu0 1
  %60 = vperm.xlu0 %59, %v22
  %v61 = vpop.permute.xlu0 %60
  %63 = vset.pattern.permute.xlu0 1
  %64 = vperm.xlu0 %63, %v23
  %v65 = vpop.permute.xlu0 %64
  %67 = vset.pattern.permute.xlu0 1
  %68 = vperm.xlu0 %67, %v24
  %v69 = vpop.permute.xlu0 %68
  %v71 = vadd.f32 %v51, %v57
  %v72 = vadd.f32 %v52, %v61
  %v73 = vadd.f32 %v53, %v65
  %v74 = vadd.f32 %v54, %v69
  %vm75 = vcmp.ge.f32.partialorder %v71, 0.0
  %vm76 = vcmp.ge.f32.partialorder %v72, 0.0
  %vm77 = vcmp.ge.f32.partialorder %v73, 0.0
  %vm78 = vcmp.ge.f32.partialorder %v74, 0.0
  %v79 = vmul.f32 %v71, 0.05
  %v80 = vmul.f32 %v72, 0.05
  %v81 = vmul.f32 %v73, 0.05
  %v82 = vmul.f32 %v74, 0.05
  %v83 = vsel %vm75, %v71, %v79
  %v84 = vsel %vm76, %v72, %v80
  %v85 = vsel %vm77, %v73, %v81
  %v86 = vsel %vm78, %v74, %v82
  %v87 = vld [vmem:[%s2] sm:$0xff]
  %v88 = vld [vmem:[%s2 + $0x8] sm:$0xff]
  %v89 = vld [vmem:[%s2 + $0x10] sm:$0xff]
  %v90 = vld [vmem:[%s2 + $0x18] sm:$0xff]
  %91 = vset.pattern.permute.xlu0 2
  %92 = vperm.xlu0 %91, %v21
  %v93 = vpop.permute.xlu0 %92
  %95 = vset.pattern.permute.xlu0 2
  %96 = vperm.xlu0 %95, %v22
  %v97 = vpop.permute.xlu0 %96
  %99 = vset.pattern.permute.xlu0 2
  %100 = vperm.xlu0 %99, %v23
  %v101 = vpop.permute.xlu0 %100
  %103 = vset.pattern.permute.xlu0 2
  %104 = vperm.xlu0 %103, %v24
  %v105 = vpop.permute.xlu0 %104
  %vm107 = vcmask 261120
  %v109 = vsel %vm107, %v87, 0
  %v112 = vsel %vm107, %v88, 0
  %v115 = vsel %vm107, %v89, 0
  %v118 = vsel %vm107, %v90, 0
  %120 = vmatprep.subr.mxu0 0.0
  %121 = vmatpush1.msra.mxu0 %v83
  %122 = vmatprep.subr.mxu0 0.0
  %123 = vmatpush1.msra.mxu0 %v84
  %124 = vmatprep.subr.mxu0 0.0
  %125 = vmatpush1.msra.mxu0 %v85
  %126 = vmatprep.subr.mxu0 0.0
  %127 = vmatpush1.msra.mxu0 %v86
  %128 = vmatprep.subr.mxu0 0.0
  %129 = vmatpush1.msra.mxu0 0.0
  %130 = vmatprep.subr.mxu0 0.0
  %131 = vmatpush1.msra.mxu0 0.0
  %132 = vmatprep.subr.mxu0 0.0
  %133 = vmatpush1.msra.mxu0 0.0
  %134 = vmatprep.subr.mxu0 0.0
  %135 = vmatpush1.msra.mxu0 0.0
  %136 = vmatprep.subr.mxu0 0.0
  %137 = vmatpush1.msra.mxu0 0.0
  %138 = vmatprep.subr.mxu0 0.0
  %139 = vmatpush1.msra.mxu0 0.0
  %140 = vmatprep.subr.mxu0 0.0
  %141 = vmatpush1.msra.mxu0 0.0
  %142 = vmatprep.subr.mxu0 0.0
  %143 = vmatpush1.msra.mxu0 0.0
  %144 = vmatprep.subr.mxu0 0.0
  %145 = vmatpush1.msra.mxu0 0.0
  %146 = vmatprep.subr.mxu0 0.0
  %147 = vmatpush1.msra.mxu0 0.0
  %148 = vmatprep.subr.mxu0 0.0
  %149 = vmatpush1.msra.mxu0 0.0
  %150 = vmatprep.subr.mxu0 0.0
  %151 = vmatpush1.msra.mxu0 0.0
  %152 = vmatprep.subr.mxu0 0.0
  %153 = vmatpush1.msra.mxu0 0.0
  %154 = vmatprep.subr.mxu0 0.0
  %155 = vmatpush1.msra.mxu0 0.0
  %156 = vmatprep.subr.mxu0 0.0
  %157 = vmatpush1.msra.mxu0 0.0
  %158 = vmatprep.subr.mxu0 0.0
  %159 = vmatpush1.msra.mxu0 0.0
  %160 = vmatprep.subr.mxu0 0.0
  %161 = vmatpush1.msra.mxu0 0.0
  %162 = vmatprep.subr.mxu0 0.0
  %163 = vmatpush1.msra.mxu0 0.0
  %164 = vmatprep.subr.mxu0 0.0
  %165 = vmatpush1.msra.mxu0 0.0
  %166 = vmatprep.subr.mxu0 0.0
  %167 = vmatpush1.msra.mxu0 0.0
  %168 = vmatprep.subr.mxu0 0.0
  %169 = vmatpush1.msra.mxu0 0.0
  %170 = vmatprep.subr.mxu0 0.0
  %171 = vmatpush1.msra.mxu0 0.0
  %172 = vmatprep.subr.mxu0 0.0
  %173 = vmatpush1.msra.mxu0 0.0
  %174 = vmatprep.subr.mxu0 0.0
  %175 = vmatpush1.msra.mxu0 0.0
  %176 = vmatprep.subr.mxu0 0.0
  %177 = vmatpush1.msra.mxu0 0.0
  %178 = vmatprep.subr.mxu0 0.0
  %179 = vmatpush1.msra.mxu0 0.0
  %180 = vmatprep.subr.mxu0 0.0
  %181 = vmatpush1.msra.mxu0 0.0
  %182 = vmatprep.subr.mxu0 0.0
  %183 = vmatpush1.msra.mxu0 0.0
  %184 = vmatprep.mubr.f32.mxu0 0.0
  %185 = vmatmul.mubr.f32.gmra.mrb[0].mxu0 %v109
  %v186 = vpop.f32.mrb[0].mxu0
  %v187 = vadd.f32 %v93, %v186
  %v188 = vpop.f32.mrb[0].mxu0
  %189 = vmatprep.mubr.f32.mxu0 0.0
  %190 = vmatmul.mubr.f32.gmra.mrb[0].mxu0 %v112
  %v191 = vpop.f32.mrb[0].mxu0
  %v192 = vadd.f32 %v97, %v191
  %v193 = vpop.f32.mrb[0].mxu0
  %194 = vmatprep.mubr.f32.mxu0 0.0
  %195 = vmatmul.mubr.f32.gmra.mrb[0].mxu0 %v115
  %v196 = vpop.f32.mrb[0].mxu0
  %v197 = vadd.f32 %v101, %v196
  %v198 = vpop.f32.mrb[0].mxu0
  %199 = vmatprep.mubr.f32.mxu0 0.0
  %200 = vmatmul.mubr.f32.gmra.mrb[0].mxu0 %v118
  %v201 = vpop.f32.mrb[0].mxu0
  %v202 = vadd.f32 %v105, %v201
  %v203 = vpop.f32.mrb[0].mxu0
  %204 = vdwg.mxu0
  %vm205 = vcmp.ge.f32.partialorder %v187, 0.0
  %vm206 = vcmp.ge.f32.partialorder %v192, 0.0
  %vm207 = vcmp.ge.f32.partialorder %v197, 0.0
  %vm208 = vcmp.ge.f32.partialorder %v202, 0.0
  %v209 = vmul.f32 %v187, 0.05
  %v210 = vmul.f32 %v192, 0.05
  %v211 = vmul.f32 %v197, 0.05
  %v212 = vmul.f32 %v202, 0.05
  %v213 = vsel %vm205, %v187, %v209
  %v214 = vsel %vm206, %v192, %v210
  %v215 = vsel %vm207, %v197, %v211
  %v216 = vsel %vm208, %v202, %v212
  %s217 = scalar_lea.vmem %s2, 32
  %v218 = vld [vmem:[%s217] sm:$0xff]
  %v219 = vld [vmem:[%s217 + $0x8] sm:$0xff]
  %v220 = vld [vmem:[%s217 + $0x10] sm:$0xff]
  %v221 = vld [vmem:[%s217 + $0x18] sm:$0xff]
  %222 = vset.pattern.permute.xlu0 3
  %223 = vperm.xlu0 %222, %v21
  %v224 = vpop.permute.xlu0 %223
  %226 = vset.pattern.permute.xlu0 3
  %227 = vperm.xlu0 %226, %v22
  %v228 = vpop.permute.xlu0 %227
  %230 = vset.pattern.permute.xlu0 3
  %231 = vperm.xlu0 %230, %v23
  %v232 = vpop.permute.xlu0 %231
  %234 = vset.pattern.permute.xlu0 3
  %235 = vperm.xlu0 %234, %v24
  %v236 = vpop.permute.xlu0 %235
  %v239 = vsel %vm107, %v218, 0
  %v242 = vsel %vm107, %v219, 0
  %v245 = vsel %vm107, %v220, 0
  %v248 = vsel %vm107, %v221, 0
  %250 = vmatprep.subr.mxu0 0.0
  %251 = vmatpush1.msra.mxu0 %v213
  %252 = vmatprep.subr.mxu0 0.0
  %253 = vmatpush1.msra.mxu0 %v214
  %254 = vmatprep.subr.mxu0 0.0
  %255 = vmatpush1.msra.mxu0 %v215
  %256 = vmatprep.subr.mxu0 0.0
  %257 = vmatpush1.msra.mxu0 %v216
  %258 = vmatprep.subr.mxu0 0.0
  %259 = vmatpush1.msra.mxu0 0.0
  %260 = vmatprep.subr.mxu0 0.0
  %261 = vmatpush1.msra.mxu0 0.0
  %262 = vmatprep.subr.mxu0 0.0
  %263 = vmatpush1.msra.mxu0 0.0
  %264 = vmatprep.subr.mxu0 0.0
  %265 = vmatpush1.msra.mxu0 0.0
  %266 = vmatprep.subr.mxu0 0.0
  %267 = vmatpush1.msra.mxu0 0.0
  %268 = vmatprep.subr.mxu0 0.0
  %269 = vmatpush1.msra.mxu0 0.0
  %270 = vmatprep.subr.mxu0 0.0
  %271 = vmatpush1.msra.mxu0 0.0
  %272 = vmatprep.subr.mxu0 0.0
  %273 = vmatpush1.msra.mxu0 0.0
  %274 = vmatprep.subr.mxu0 0.0
  %275 = vmatpush1.msra.mxu0 0.0
  %276 = vmatprep.subr.mxu0 0.0
  %277 = vmatpush1.msra.mxu0 0.0
  %278 = vmatprep.subr.mxu0 0.0
  %279 = vmatpush1.msra.mxu0 0.0
  %280 = vmatprep.subr.mxu0 0.0
  %281 = vmatpush1.msra.mxu0 0.0
  %282 = vmatprep.subr.mxu0 0.0
  %283 = vmatpush1.msra.mxu0 0.0
  %284 = vmatprep.subr.mxu0 0.0
  %285 = vmatpush1.msra.mxu0 0.0
  %286 = vmatprep.subr.mxu0 0.0
  %287 = vmatpush1.msra.mxu0 0.0
  %288 = vmatprep.subr.mxu0 0.0
  %289 = vmatpush1.msra.mxu0 0.0
  %290 = vmatprep.subr.mxu0 0.0
  %291 = vmatpush1.msra.mxu0 0.0
  %292 = vmatprep.subr.mxu0 0.0
  %293 = vmatpush1.msra.mxu0 0.0
  %294 = vmatprep.subr.mxu0 0.0
  %295 = vmatpush1.msra.mxu0 0.0
  %296 = vmatprep.subr.mxu0 0.0
  %297 = vmatpush1.msra.mxu0 0.0
  %298 = vmatprep.subr.mxu0 0.0
  %299 = vmatpush1.msra.mxu0 0.0
  %300 = vmatprep.subr.mxu0 0.0
  %301 = vmatpush1.msra.mxu0 0.0
  %302 = vmatprep.subr.mxu0 0.0
  %303 = vmatpush1.msra.mxu0 0.0
  %304 = vmatprep.subr.mxu0 0.0
  %305 = vmatpush1.msra.mxu0 0.0
  %306 = vmatprep.subr.mxu0 0.0
  %307 = vmatpush1.msra.mxu0 0.0
  %308 = vmatprep.subr.mxu0 0.0
  %309 = vmatpush1.msra.mxu0 0.0
  %310 = vmatprep.subr.mxu0 0.0
  %311 = vmatpush1.msra.mxu0 0.0
  %312 = vmatprep.subr.mxu0 0.0
  %313 = vmatpush1.msra.mxu0 0.0
  %314 = vmatprep.mubr.f32.mxu0 0.0
  %315 = vmatmul.mubr.f32.gmra.mrb[0].mxu0 %v239
  %v316 = vpop.f32.mrb[0].mxu0
  %v317 = vadd.f32 %v224, %v316
  %v318 = vpop.f32.mrb[0].mxu0
  %319 = vmatprep.mubr.f32.mxu0 0.0
  %320 = vmatmul.mubr.f32.gmra.mrb[0].mxu0 %v242
  %v321 = vpop.f32.mrb[0].mxu0
  %v322 = vadd.f32 %v228, %v321
  %v323 = vpop.f32.mrb[0].mxu0
  %324 = vmatprep.mubr.f32.mxu0 0.0
  %325 = vmatmul.mubr.f32.gmra.mrb[0].mxu0 %v245
  %v326 = vpop.f32.mrb[0].mxu0
  %v327 = vadd.f32 %v232, %v326
  %v328 = vpop.f32.mrb[0].mxu0
  %329 = vmatprep.mubr.f32.mxu0 0.0
  %330 = vmatmul.mubr.f32.gmra.mrb[0].mxu0 %v248
  %v331 = vpop.f32.mrb[0].mxu0
  %v332 = vadd.f32 %v236, %v331
  %v333 = vpop.f32.mrb[0].mxu0
  %334 = vdwg.mxu0
  %335 = vst [vmem:[%s5] sm:$0xff] %v317
  %336 = vst [vmem:[%s5 + $0x8] sm:$0xff] %v322
  %337 = vst [vmem:[%s5 + $0x10] sm:$0xff] %v327
  %338 = vst [vmem:[%s5 + $0x18] sm:$0xff] %v332
  %v339 = vld [vmem:[%s1] sm:$0xff]
  %v340 = vld [vmem:[%s1 + $0x8] sm:$0xff]
  %vm341 = vcmask 130048
  %v343 = vsel %vm341, %v317, 0
  %v346 = vsel %vm341, %v322, 0
  %v349 = vsel %vm341, %v327, 0
  %v352 = vsel %vm341, %v332, 0
  %354 = vmatprep.subr.mxu0 0.0
  %355 = vmatpush1.msra.mxu0 %v339
  %356 = vmatprep.subr.mxu0 0.0
  %357 = vmatpush1.msra.mxu0 %v340
  %358 = vmatprep.subr.mxu0 0.0
  %359 = vmatpush1.msra.mxu0 0.0
  %360 = vmatprep.subr.mxu0 0.0
  %361 = vmatpush1.msra.mxu0 0.0
  %362 = vmatprep.subr.mxu0 0.0
  %363 = vmatpush1.msra.mxu0 0.0
  %364 = vmatprep.subr.mxu0 0.0
  %365 = vmatpush1.msra.mxu0 0.0
  %366 = vmatprep.subr.mxu0 0.0
  %367 = vmatpush1.msra.mxu0 0.0
  %368 = vmatprep.subr.mxu0 0.0
  %369 = vmatpush1.msra.mxu0 0.0
  %370 = vmatprep.subr.mxu0 0.0
  %371 = vmatpush1.msra.mxu0 0.0
  %372 = vmatprep.subr.mxu0 0.0
  %373 = vmatpush1.msra.mxu0 0.0
  %374 = vmatprep.subr.mxu0 0.0
  %375 = vmatpush1.msra.mxu0 0.0
  %376 = vmatprep.subr.mxu0 0.0
  %377 = vmatpush1.msra.mxu0 0.0
  %378 = vmatprep.subr.mxu0 0.0
  %379 = vmatpush1.msra.mxu0 0.0
  %380 = vmatprep.subr.mxu0 0.0
  %381 = vmatpush1.msra.mxu0 0.0
  %382 = vmatprep.subr.mxu0 0.0
  %383 = vmatpush1.msra.mxu0 0.0
  %384 = vmatprep.subr.mxu0 0.0
  %385 = vmatpush1.msra.mxu0 0.0
  %386 = vmatprep.subr.mxu0 0.0
  %387 = vmatpush1.msra.mxu0 0.0
  %388 = vmatprep.subr.mxu0 0.0
  %389 = vmatpush1.msra.mxu0 0.0
  %390 = vmatprep.subr.mxu0 0.0
  %391 = vmatpush1.msra.mxu0 0.0
  %392 = vmatprep.subr.mxu0 0.0
  %393 = vmatpush1.msra.mxu0 0.0
  %394 = vmatprep.subr.mxu0 0.0
  %395 = vmatpush1.msra.mxu0 0.0
  %396 = vmatprep.subr.mxu0 0.0
  %397 = vmatpush1.msra.mxu0 0.0
  %398 = vmatprep.subr.mxu0 0.0
  %399 = vmatpush1.msra.mxu0 0.0
  %400 = vmatprep.subr.mxu0 0.0
  %401 = vmatpush1.msra.mxu0 0.0
  %402 = vmatprep.subr.mxu0 0.0
  %403 = vmatpush1.msra.mxu0 0.0
  %404 = vmatprep.subr.mxu0 0.0
  %405 = vmatpush1.msra.mxu0 0.0
  %406 = vmatprep.subr.mxu0 0.0
  %407 = vmatpush1.msra.mxu0 0.0
  %408 = vmatprep.subr.mxu0 0.0
  %409 = vmatpush1.msra.mxu0 0.0
  %410 = vmatprep.subr.mxu0 0.0
  %411 = vmatpush1.msra.mxu0 0.0
  %412 = vmatprep.subr.mxu0 0.0
  %413 = vmatpush1.msra.mxu0 0.0
  %414 = vmatprep.subr.mxu0 0.0
  %415 = vmatpush1.msra.mxu0 0.0
  %416 = vmatprep.subr.mxu0 0.0
  %417 = vmatpush1.msra.mxu0 0.0
  %418 = vmatprep.mubr.f32.mxu0 0.0
  %419 = vmatmul.mubr.f32.gmra.mrb[0].mxu0 %v343
  %v420 = vpop.f32.mrb[0].mxu0
  %v421 = vadd.f32 0.0, %v420
  %v422 = vpop.f32.mrb[0].mxu0
  %423 = vmatprep.mubr.f32.mxu0 0.0
  %424 = vmatmul.mubr.f32.gmra.mrb[0].mxu0 %v346
  %v425 = vpop.f32.mrb[0].mxu0
  %v426 = vadd.f32 0.0, %v425
  %v427 = vpop.f32.mrb[0].mxu0
  %428 = vmatprep.mubr.f32.mxu0 0.0
  %429 = vmatmul.mubr.f32.gmra.mrb[0].mxu0 %v349
  %v430 = vpop.f32.mrb[0].mxu0
  %v431 = vadd.f32 0.0, %v430
  %v432 = vpop.f32.mrb[0].mxu0
  %433 = vmatprep.mubr.f32.mxu0 0.0
  %434 = vmatmul.mubr.f32.gmra.mrb[0].mxu0 %v352
  %v435 = vpop.f32.mrb[0].mxu0
  %v436 = vadd.f32 0.0, %v435
  %v437 = vpop.f32.mrb[0].mxu0
  %438 = vdwg.mxu0
  %439 = vrot.lane.b32.xlu0 %v317, 112
  %v440 = vpop.permute.xlu0 %439
  %441 = vrot.lane.b32.xlu0 %v322, 112
  %v442 = vpop.permute.xlu0 %441
  %443 = vrot.lane.b32.xlu0 %v327, 112
  %v444 = vpop.permute.xlu0 %443
  %445 = vrot.lane.b32.xlu0 %v332, 112
  %v446 = vpop.permute.xlu0 %445
  %v447 = vsel %vm341, %v440, 0
  %v449 = vsel %vm341, %v442, 0
  %v451 = vsel %vm341, %v444, 0
  %v453 = vsel %vm341, %v446, 0
  %455 = vmatprep.subr.mxu0 0.0
  %456 = vmatpush1.msra.mxu0 %v339
  %457 = vmatprep.subr.mxu0 0.0
  %458 = vmatpush1.msra.mxu0 %v340
  %459 = vmatprep.subr.mxu0 0.0
  %460 = vmatpush1.msra.mxu0 0.0
  %461 = vmatprep.subr.mxu0 0.0
  %462 = vmatpush1.msra.mxu0 0.0
  %463 = vmatprep.subr.mxu0 0.0
  %464 = vmatpush1.msra.mxu0 0.0
  %465 = vmatprep.subr.mxu0 0.0
  %466 = vmatpush1.msra.mxu0 0.0
  %467 = vmatprep.subr.mxu0 0.0
  %468 = vmatpush1.msra.mxu0 0.0
  %469 = vmatprep.subr.mxu0 0.0
  %470 = vmatpush1.msra.mxu0 0.0
  %471 = vmatprep.subr.mxu0 0.0
  %472 = vmatpush1.msra.mxu0 0.0
  %473 = vmatprep.subr.mxu0 0.0
  %474 = vmatpush1.msra.mxu0 0.0
  %475 = vmatprep.subr.mxu0 0.0
  %476 = vmatpush1.msra.mxu0 0.0
  %477 = vmatprep.subr.mxu0 0.0
  %478 = vmatpush1.msra.mxu0 0.0
  %479 = vmatprep.subr.mxu0 0.0
  %480 = vmatpush1.msra.mxu0 0.0
  %481 = vmatprep.subr.mxu0 0.0
  %482 = vmatpush1.msra.mxu0 0.0
  %483 = vmatprep.subr.mxu0 0.0
  %484 = vmatpush1.msra.mxu0 0.0
  %485 = vmatprep.subr.mxu0 0.0
  %486 = vmatpush1.msra.mxu0 0.0
  %487 = vmatprep.subr.mxu0 0.0
  %488 = vmatpush1.msra.mxu0 0.0
  %489 = vmatprep.subr.mxu0 0.0
  %490 = vmatpush1.msra.mxu0 0.0
  %491 = vmatprep.subr.mxu0 0.0
  %492 = vmatpush1.msra.mxu0 0.0
  %493 = vmatprep.subr.mxu0 0.0
  %494 = vmatpush1.msra.mxu0 0.0
  %495 = vmatprep.subr.mxu0 0.0
  %496 = vmatpush1.msra.mxu0 0.0
  %497 = vmatprep.subr.mxu0 0.0
  %498 = vmatpush1.msra.mxu0 0.0
  %499 = vmatprep.subr.mxu0 0.0
  %500 = vmatpush1.msra.mxu0 0.0
  %501 = vmatprep.subr.mxu0 0.0
  %502 = vmatpush1.msra.mxu0 0.0
  %503 = vmatprep.subr.mxu0 0.0
  %504 = vmatpush1.msra.mxu0 0.0
  %505 = vmatprep.subr.mxu0 0.0
  %506 = vmatpush1.msra.mxu0 0.0
  %507 = vmatprep.subr.mxu0 0.0
  %508 = vmatpush1.msra.mxu0 0.0
  %509 = vmatprep.subr.mxu0 0.0
  %510 = vmatpush1.msra.mxu0 0.0
  %511 = vmatprep.subr.mxu0 0.0
  %512 = vmatpush1.msra.mxu0 0.0
  %513 = vmatprep.subr.mxu0 0.0
  %514 = vmatpush1.msra.mxu0 0.0
  %515 = vmatprep.subr.mxu0 0.0
  %516 = vmatpush1.msra.mxu0 0.0
  %517 = vmatprep.subr.mxu0 0.0
  %518 = vmatpush1.msra.mxu0 0.0
  %519 = vmatprep.mubr.f32.mxu0 0.0
  %520 = vmatmul.mubr.f32.gmra.mrb[0].mxu0 %v447
  %v521 = vpop.f32.mrb[0].mxu0
  %v522 = vadd.f32 0.0, %v521
  %v523 = vpop.f32.mrb[0].mxu0
  %524 = vmatprep.mubr.f32.mxu0 0.0
  %525 = vmatmul.mubr.f32.gmra.mrb[0].mxu0 %v449
  %v526 = vpop.f32.mrb[0].mxu0
  %v527 = vadd.f32 0.0, %v526
  %v528 = vpop.f32.mrb[0].mxu0
  %529 = vmatprep.mubr.f32.mxu0 0.0
  %530 = vmatmul.mubr.f32.gmra.mrb[0].mxu0 %v451
  %v531 = vpop.f32.mrb[0].mxu0
  %v532 = vadd.f32 0.0, %v531
  %v533 = vpop.f32.mrb[0].mxu0
  %534 = vmatprep.mubr.f32.mxu0 0.0
  %535 = vmatmul.mubr.f32.gmra.mrb[0].mxu0 %v453
  %v536 = vpop.f32.mrb[0].mxu0
  %v537 = vadd.f32 0.0, %v536
  %v538 = vpop.f32.mrb[0].mxu0
  %539 = vdwg.mxu0
  %540 = vrot.lane.b32.xlu0 %v317, 96
  %v541 = vpop.permute.xlu0 %540
  %542 = vrot.lane.b32.xlu0 %v322, 96
  %v543 = vpop.permute.xlu0 %542
  %544 = vrot.lane.b32.xlu0 %v327, 96
  %v545 = vpop.permute.xlu0 %544
  %546 = vrot.lane.b32.xlu0 %v332, 96
  %v547 = vpop.permute.xlu0 %546
  %v548 = vsel %vm341, %v541, 0
  %v550 = vsel %vm341, %v543, 0
  %v552 = vsel %vm341, %v545, 0
  %v554 = vsel %vm341, %v547, 0
  %556 = vmatprep.subr.mxu0 0.0
  %557 = vmatpush1.msra.mxu0 %v339
  %558 = vmatprep.subr.mxu0 0.0
  %559 = vmatpush1.msra.mxu0 %v340
  %560 = vmatprep.subr.mxu0 0.0
  %561 = vmatpush1.msra.mxu0 0.0
  %562 = vmatprep.subr.mxu0 0.0
  %563 = vmatpush1.msra.mxu0 0.0
  %564 = vmatprep.subr.mxu0 0.0
  %565 = vmatpush1.msra.mxu0 0.0
  %566 = vmatprep.subr.mxu0 0.0
  %567 = vmatpush1.msra.mxu0 0.0
  %568 = vmatprep.subr.mxu0 0.0
  %569 = vmatpush1.msra.mxu0 0.0
  %570 = vmatprep.subr.mxu0 0.0
  %571 = vmatpush1.msra.mxu0 0.0
  %572 = vmatprep.subr.mxu0 0.0
  %573 = vmatpush1.msra.mxu0 0.0
  %574 = vmatprep.subr.mxu0 0.0
  %575 = vmatpush1.msra.mxu0 0.0
  %576 = vmatprep.subr.mxu0 0.0
  %577 = vmatpush1.msra.mxu0 0.0
  %578 = vmatprep.subr.mxu0 0.0
  %579 = vmatpush1.msra.mxu0 0.0
  %580 = vmatprep.subr.mxu0 0.0
  %581 = vmatpush1.msra.mxu0 0.0
  %582 = vmatprep.subr.mxu0 0.0
  %583 = vmatpush1.msra.mxu0 0.0
  %584 = vmatprep.subr.mxu0 0.0
  %585 = vmatpush1.msra.mxu0 0.0
  %586 = vmatprep.subr.mxu0 0.0
  %587 = vmatpush1.msra.mxu0 0.0
  %588 = vmatprep.subr.mxu0 0.0
  %589 = vmatpush1.msra.mxu0 0.0
  %590 = vmatprep.subr.mxu0 0.0
  %591 = vmatpush1.msra.mxu0 0.0
  %592 = vmatprep.subr.mxu0 0.0
  %593 = vmatpush1.msra.mxu0 0.0
  %594 = vmatprep.subr.mxu0 0.0
  %595 = vmatpush1.msra.mxu0 0.0
  %596 = vmatprep.subr.mxu0 0.0
  %597 = vmatpush1.msra.mxu0 0.0
  %598 = vmatprep.subr.mxu0 0.0
  %599 = vmatpush1.msra.mxu0 0.0
  %600 = vmatprep.subr.mxu0 0.0
  %601 = vmatpush1.msra.mxu0 0.0
  %602 = vmatprep.subr.mxu0 0.0
  %603 = vmatpush1.msra.mxu0 0.0
  %604 = vmatprep.subr.mxu0 0.0
  %605 = vmatpush1.msra.mxu0 0.0
  %606 = vmatprep.subr.mxu0 0.0
  %607 = vmatpush1.msra.mxu0 0.0
  %608 = vmatprep.subr.mxu0 0.0
  %609 = vmatpush1.msra.mxu0 0.0
  %610 = vmatprep.subr.mxu0 0.0
  %611 = vmatpush1.msra.mxu0 0.0
  %612 = vmatprep.subr.mxu0 0.0
  %613 = vmatpush1.msra.mxu0 0.0
  %614 = vmatprep.subr.mxu0 0.0
  %615 = vmatpush1.msra.mxu0 0.0
  %616 = vmatprep.subr.mxu0 0.0
  %617 = vmatpush1.msra.mxu0 0.0
  %618 = vmatprep.subr.mxu0 0.0
  %619 = vmatpush1.msra.mxu0 0.0
  %620 = vmatprep.mubr.f32.mxu0 0.0
  %621 = vmatmul.mubr.f32.gmra.mrb[0].mxu0 %v548
  %v622 = vpop.f32.mrb[0].mxu0
  %v623 = vadd.f32 0.0, %v622
  %v624 = vpop.f32.mrb[0].mxu0
  %625 = vmatprep.mubr.f32.mxu0 0.0
  %626 = vmatmul.mubr.f32.gmra.mrb[0].mxu0 %v550
  %v627 = vpop.f32.mrb[0].mxu0
  %v628 = vadd.f32 0.0, %v627
  %v629 = vpop.f32.mrb[0].mxu0
  %630 = vmatprep.mubr.f32.mxu0 0.0
  %631 = vmatmul.mubr.f32.gmra.mrb[0].mxu0 %v552
  %v632 = vpop.f32.mrb[0].mxu0
  %v633 = vadd.f32 0.0, %v632
  %v634 = vpop.f32.mrb[0].mxu0
  %635 = vmatprep.mubr.f32.mxu0 0.0
  %636 = vmatmul.mubr.f32.gmra.mrb[0].mxu0 %v554
  %v637 = vpop.f32.mrb[0].mxu0
  %v638 = vadd.f32 0.0, %v637
  %v639 = vpop.f32.mrb[0].mxu0
  %640 = vdwg.mxu0
  %641 = vrot.lane.b32.xlu0 %v317, 80
  %v642 = vpop.permute.xlu0 %641
  %643 = vrot.lane.b32.xlu0 %v322, 80
  %v644 = vpop.permute.xlu0 %643
  %645 = vrot.lane.b32.xlu0 %v327, 80
  %v646 = vpop.permute.xlu0 %645
  %647 = vrot.lane.b32.xlu0 %v332, 80
  %v648 = vpop.permute.xlu0 %647
  %v649 = vsel %vm341, %v642, 0
  %v651 = vsel %vm341, %v644, 0
  %v653 = vsel %vm341, %v646, 0
  %v655 = vsel %vm341, %v648, 0
  %657 = vmatprep.subr.mxu0 0.0
  %658 = vmatpush1.msra.mxu0 %v339
  %659 = vmatprep.subr.mxu0 0.0
  %660 = vmatpush1.msra.mxu0 %v340
  %661 = vmatprep.subr.mxu0 0.0
  %662 = vmatpush1.msra.mxu0 0.0
  %663 = vmatprep.subr.mxu0 0.0
  %664 = vmatpush1.msra.mxu0 0.0
  %665 = vmatprep.subr.mxu0 0.0
  %666 = vmatpush1.msra.mxu0 0.0
  %667 = vmatprep.subr.mxu0 0.0
  %668 = vmatpush1.msra.mxu0 0.0
  %669 = vmatprep.subr.mxu0 0.0
  %670 = vmatpush1.msra.mxu0 0.0
  %671 = vmatprep.subr.mxu0 0.0
  %672 = vmatpush1.msra.mxu0 0.0
  %673 = vmatprep.subr.mxu0 0.0
  %674 = vmatpush1.msra.mxu0 0.0
  %675 = vmatprep.subr.mxu0 0.0
  %676 = vmatpush1.msra.mxu0 0.0
  %677 = vmatprep.subr.mxu0 0.0
  %678 = vmatpush1.msra.mxu0 0.0
  %679 = vmatprep.subr.mxu0 0.0
  %680 = vmatpush1.msra.mxu0 0.0
  %681 = vmatprep.subr.mxu0 0.0
  %682 = vmatpush1.msra.mxu0 0.0
  %683 = vmatprep.subr.mxu0 0.0
  %684 = vmatpush1.msra.mxu0 0.0
  %685 = vmatprep.subr.mxu0 0.0
  %686 = vmatpush1.msra.mxu0 0.0
  %687 = vmatprep.subr.mxu0 0.0
  %688 = vmatpush1.msra.mxu0 0.0
  %689 = vmatprep.subr.mxu0 0.0
  %690 = vmatpush1.msra.mxu0 0.0
  %691 = vmatprep.subr.mxu0 0.0
  %692 = vmatpush1.msra.mxu0 0.0
  %693 = vmatprep.subr.mxu0 0.0
  %694 = vmatpush1.msra.mxu0 0.0
  %695 = vmatprep.subr.mxu0 0.0
  %696 = vmatpush1.msra.mxu0 0.0
  %697 = vmatprep.subr.mxu0 0.0
  %698 = vmatpush1.msra.mxu0 0.0
  %699 = vmatprep.subr.mxu0 0.0
  %700 = vmatpush1.msra.mxu0 0.0
  %701 = vmatprep.subr.mxu0 0.0
  %702 = vmatpush1.msra.mxu0 0.0
  %703 = vmatprep.subr.mxu0 0.0
  %704 = vmatpush1.msra.mxu0 0.0
  %705 = vmatprep.subr.mxu0 0.0
  %706 = vmatpush1.msra.mxu0 0.0
  %707 = vmatprep.subr.mxu0 0.0
  %708 = vmatpush1.msra.mxu0 0.0
  %709 = vmatprep.subr.mxu0 0.0
  %710 = vmatpush1.msra.mxu0 0.0
  %711 = vmatprep.subr.mxu0 0.0
  %712 = vmatpush1.msra.mxu0 0.0
  %713 = vmatprep.subr.mxu0 0.0
  %714 = vmatpush1.msra.mxu0 0.0
  %715 = vmatprep.subr.mxu0 0.0
  %716 = vmatpush1.msra.mxu0 0.0
  %717 = vmatprep.subr.mxu0 0.0
  %718 = vmatpush1.msra.mxu0 0.0
  %719 = vmatprep.subr.mxu0 0.0
  %720 = vmatpush1.msra.mxu0 0.0
  %721 = vmatprep.mubr.f32.mxu0 0.0
  %722 = vmatmul.mubr.f32.gmra.mrb[0].mxu0 %v649
  %v723 = vpop.f32.mrb[0].mxu0
  %v724 = vadd.f32 0.0, %v723
  %v725 = vpop.f32.mrb[0].mxu0
  %726 = vmatprep.mubr.f32.mxu0 0.0
  %727 = vmatmul.mubr.f32.gmra.mrb[0].mxu0 %v651
  %v728 = vpop.f32.mrb[0].mxu0
  %v729 = vadd.f32 0.0, %v728
  %v730 = vpop.f32.mrb[0].mxu0
  %731 = vmatprep.mubr.f32.mxu0 0.0
  %732 = vmatmul.mubr.f32.gmra.mrb[0].mxu0 %v653
  %v733 = vpop.f32.mrb[0].mxu0
  %v734 = vadd.f32 0.0, %v733
  %v735 = vpop.f32.mrb[0].mxu0
  %736 = vmatprep.mubr.f32.mxu0 0.0
  %737 = vmatmul.mubr.f32.gmra.mrb[0].mxu0 %v655
  %v738 = vpop.f32.mrb[0].mxu0
  %v739 = vadd.f32 0.0, %v738
  %v740 = vpop.f32.mrb[0].mxu0
  %741 = vdwg.mxu0
  %742 = vrot.lane.b32.xlu0 %v317, 64
  %v743 = vpop.permute.xlu0 %742
  %744 = vrot.lane.b32.xlu0 %v322, 64
  %v745 = vpop.permute.xlu0 %744
  %746 = vrot.lane.b32.xlu0 %v327, 64
  %v747 = vpop.permute.xlu0 %746
  %748 = vrot.lane.b32.xlu0 %v332, 64
  %v749 = vpop.permute.xlu0 %748
  %v750 = vsel %vm341, %v743, 0
  %v752 = vsel %vm341, %v745, 0
  %v754 = vsel %vm341, %v747, 0
  %v756 = vsel %vm341, %v749, 0
  %758 = vmatprep.subr.mxu0 0.0
  %759 = vmatpush1.msra.mxu0 %v339
  %760 = vmatprep.subr.mxu0 0.0
  %761 = vmatpush1.msra.mxu0 %v340
  %762 = vmatprep.subr.mxu0 0.0
  %763 = vmatpush1.msra.mxu0 0.0
  %764 = vmatprep.subr.mxu0 0.0
  %765 = vmatpush1.msra.mxu0 0.0
  %766 = vmatprep.subr.mxu0 0.0
  %767 = vmatpush1.msra.mxu0 0.0
  %768 = vmatprep.subr.mxu0 0.0
  %769 = vmatpush1.msra.mxu0 0.0
  %770 = vmatprep.subr.mxu0 0.0
  %771 = vmatpush1.msra.mxu0 0.0
  %772 = vmatprep.subr.mxu0 0.0
  %773 = vmatpush1.msra.mxu0 0.0
  %774 = vmatprep.subr.mxu0 0.0
  %775 = vmatpush1.msra.mxu0 0.0
  %776 = vmatprep.subr.mxu0 0.0
  %777 = vmatpush1.msra.mxu0 0.0
  %778 = vmatprep.subr.mxu0 0.0
  %779 = vmatpush1.msra.mxu0 0.0
  %780 = vmatprep.subr.mxu0 0.0
  %781 = vmatpush1.msra.mxu0 0.0
  %782 = vmatprep.subr.mxu0 0.0
  %783 = vmatpush1.msra.mxu0 0.0
  %784 = vmatprep.subr.mxu0 0.0
  %785 = vmatpush1.msra.mxu0 0.0
  %786 = vmatprep.subr.mxu0 0.0
  %787 = vmatpush1.msra.mxu0 0.0
  %788 = vmatprep.subr.mxu0 0.0
  %789 = vmatpush1.msra.mxu0 0.0
  %790 = vmatprep.subr.mxu0 0.0
  %791 = vmatpush1.msra.mxu0 0.0
  %792 = vmatprep.subr.mxu0 0.0
  %793 = vmatpush1.msra.mxu0 0.0
  %794 = vmatprep.subr.mxu0 0.0
  %795 = vmatpush1.msra.mxu0 0.0
  %796 = vmatprep.subr.mxu0 0.0
  %797 = vmatpush1.msra.mxu0 0.0
  %798 = vmatprep.subr.mxu0 0.0
  %799 = vmatpush1.msra.mxu0 0.0
  %800 = vmatprep.subr.mxu0 0.0
  %801 = vmatpush1.msra.mxu0 0.0
  %802 = vmatprep.subr.mxu0 0.0
  %803 = vmatpush1.msra.mxu0 0.0
  %804 = vmatprep.subr.mxu0 0.0
  %805 = vmatpush1.msra.mxu0 0.0
  %806 = vmatprep.subr.mxu0 0.0
  %807 = vmatpush1.msra.mxu0 0.0
  %808 = vmatprep.subr.mxu0 0.0
  %809 = vmatpush1.msra.mxu0 0.0
  %810 = vmatprep.subr.mxu0 0.0
  %811 = vmatpush1.msra.mxu0 0.0
  %812 = vmatprep.subr.mxu0 0.0
  %813 = vmatpush1.msra.mxu0 0.0
  %814 = vmatprep.subr.mxu0 0.0
  %815 = vmatpush1.msra.mxu0 0.0
  %816 = vmatprep.subr.mxu0 0.0
  %817 = vmatpush1.msra.mxu0 0.0
  %818 = vmatprep.subr.mxu0 0.0
  %819 = vmatpush1.msra.mxu0 0.0
  %820 = vmatprep.subr.mxu0 0.0
  %821 = vmatpush1.msra.mxu0 0.0
  %822 = vmatprep.mubr.f32.mxu0 0.0
  %823 = vmatmul.mubr.f32.gmra.mrb[0].mxu0 %v750
  %v824 = vpop.f32.mrb[0].mxu0
  %v825 = vadd.f32 0.0, %v824
  %v826 = vpop.f32.mrb[0].mxu0
  %827 = vmatprep.mubr.f32.mxu0 0.0
  %828 = vmatmul.mubr.f32.gmra.mrb[0].mxu0 %v752
  %v829 = vpop.f32.mrb[0].mxu0
  %v830 = vadd.f32 0.0, %v829
  %v831 = vpop.f32.mrb[0].mxu0
  %832 = vmatprep.mubr.f32.mxu0 0.0
  %833 = vmatmul.mubr.f32.gmra.mrb[0].mxu0 %v754
  %v834 = vpop.f32.mrb[0].mxu0
  %v835 = vadd.f32 0.0, %v834
  %v836 = vpop.f32.mrb[0].mxu0
  %837 = vmatprep.mubr.f32.mxu0 0.0
  %838 = vmatmul.mubr.f32.gmra.mrb[0].mxu0 %v756
  %v839 = vpop.f32.mrb[0].mxu0
  %v840 = vadd.f32 0.0, %v839
  %v841 = vpop.f32.mrb[0].mxu0
  %842 = vdwg.mxu0
  %843 = vrot.lane.b32.xlu0 %v317, 48
  %v844 = vpop.permute.xlu0 %843
  %845 = vrot.lane.b32.xlu0 %v322, 48
  %v846 = vpop.permute.xlu0 %845
  %847 = vrot.lane.b32.xlu0 %v327, 48
  %v848 = vpop.permute.xlu0 %847
  %849 = vrot.lane.b32.xlu0 %v332, 48
  %v850 = vpop.permute.xlu0 %849
  %v851 = vsel %vm341, %v844, 0
  %v853 = vsel %vm341, %v846, 0
  %v855 = vsel %vm341, %v848, 0
  %v857 = vsel %vm341, %v850, 0
  %859 = vmatprep.subr.mxu0 0.0
  %860 = vmatpush1.msra.mxu0 %v339
  %861 = vmatprep.subr.mxu0 0.0
  %862 = vmatpush1.msra.mxu0 %v340
  %863 = vmatprep.subr.mxu0 0.0
  %864 = vmatpush1.msra.mxu0 0.0
  %865 = vmatprep.subr.mxu0 0.0
  %866 = vmatpush1.msra.mxu0 0.0
  %867 = vmatprep.subr.mxu0 0.0
  %868 = vmatpush1.msra.mxu0 0.0
  %869 = vmatprep.subr.mxu0 0.0
  %870 = vmatpush1.msra.mxu0 0.0
  %871 = vmatprep.subr.mxu0 0.0
  %872 = vmatpush1.msra.mxu0 0.0
  %873 = vmatprep.subr.mxu0 0.0
  %874 = vmatpush1.msra.mxu0 0.0
  %875 = vmatprep.subr.mxu0 0.0
  %876 = vmatpush1.msra.mxu0 0.0
  %877 = vmatprep.subr.mxu0 0.0
  %878 = vmatpush1.msra.mxu0 0.0
  %879 = vmatprep.subr.mxu0 0.0
  %880 = vmatpush1.msra.mxu0 0.0
  %881 = vmatprep.subr.mxu0 0.0
  %882 = vmatpush1.msra.mxu0 0.0
  %883 = vmatprep.subr.mxu0 0.0
  %884 = vmatpush1.msra.mxu0 0.0
  %885 = vmatprep.subr.mxu0 0.0
  %886 = vmatpush1.msra.mxu0 0.0
  %887 = vmatprep.subr.mxu0 0.0
  %888 = vmatpush1.msra.mxu0 0.0
  %889 = vmatprep.subr.mxu0 0.0
  %890 = vmatpush1.msra.mxu0 0.0
  %891 = vmatprep.subr.mxu0 0.0
  %892 = vmatpush1.msra.mxu0 0.0
  %893 = vmatprep.subr.mxu0 0.0
  %894 = vmatpush1.msra.mxu0 0.0
  %895 = vmatprep.subr.mxu0 0.0
  %896 = vmatpush1.msra.mxu0 0.0
  %897 = vmatprep.subr.mxu0 0.0
  %898 = vmatpush1.msra.mxu0 0.0
  %899 = vmatprep.subr.mxu0 0.0
  %900 = vmatpush1.msra.mxu0 0.0
  %901 = vmatprep.subr.mxu0 0.0
  %902 = vmatpush1.msra.mxu0 0.0
  %903 = vmatprep.subr.mxu0 0.0
  %904 = vmatpush1.msra.mxu0 0.0
  %905 = vmatprep.subr.mxu0 0.0
  %906 = vmatpush1.msra.mxu0 0.0
  %907 = vmatprep.subr.mxu0 0.0
  %908 = vmatpush1.msra.mxu0 0.0
  %909 = vmatprep.subr.mxu0 0.0
  %910 = vmatpush1.msra.mxu0 0.0
  %911 = vmatprep.subr.mxu0 0.0
  %912 = vmatpush1.msra.mxu0 0.0
  %913 = vmatprep.subr.mxu0 0.0
  %914 = vmatpush1.msra.mxu0 0.0
  %915 = vmatprep.subr.mxu0 0.0
  %916 = vmatpush1.msra.mxu0 0.0
  %917 = vmatprep.subr.mxu0 0.0
  %918 = vmatpush1.msra.mxu0 0.0
  %919 = vmatprep.subr.mxu0 0.0
  %920 = vmatpush1.msra.mxu0 0.0
  %921 = vmatprep.subr.mxu0 0.0
  %922 = vmatpush1.msra.mxu0 0.0
  %923 = vmatprep.mubr.f32.mxu0 0.0
  %924 = vmatmul.mubr.f32.gmra.mrb[0].mxu0 %v851
  %v925 = vpop.f32.mrb[0].mxu0
  %v926 = vadd.f32 0.0, %v925
  %v927 = vpop.f32.mrb[0].mxu0
  %928 = vmatprep.mubr.f32.mxu0 0.0
  %929 = vmatmul.mubr.f32.gmra.mrb[0].mxu0 %v853
  %v930 = vpop.f32.mrb[0].mxu0
  %v931 = vadd.f32 0.0, %v930
  %v932 = vpop.f32.mrb[0].mxu0
  %933 = vmatprep.mubr.f32.mxu0 0.0
  %934 = vmatmul.mubr.f32.gmra.mrb[0].mxu0 %v855
  %v935 = vpop.f32.mrb[0].mxu0
  %v936 = vadd.f32 0.0, %v935
  %v937 = vpop.f32.mrb[0].mxu0
  %938 = vmatprep.mubr.f32.mxu0 0.0
  %939 = vmatmul.mubr.f32.gmra.mrb[0].mxu0 %v857
  %v940 = vpop.f32.mrb[0].mxu0
  %v941 = vadd.f32 0.0, %v940
  %v942 = vpop.f32.mrb[0].mxu0
  %943 = vdwg.mxu0
  %944 = vrot.lane.b32.xlu0 %v317, 32
  %v945 = vpop.permute.xlu0 %944
  %946 = vrot.lane.b32.xlu0 %v322, 32
  %v947 = vpop.permute.xlu0 %946
  %948 = vrot.lane.b32.xlu0 %v327, 32
  %v949 = vpop.permute.xlu0 %948
  %950 = vrot.lane.b32.xlu0 %v332, 32
  %v951 = vpop.permute.xlu0 %950
  %v952 = vsel %vm341, %v945, 0
  %v954 = vsel %vm341, %v947, 0
  %v956 = vsel %vm341, %v949, 0
  %v958 = vsel %vm341, %v951, 0
  %960 = vmatprep.subr.mxu0 0.0
  %961 = vmatpush1.msra.mxu0 %v339
  %962 = vmatprep.subr.mxu0 0.0
  %963 = vmatpush1.msra.mxu0 %v340
  %964 = vmatprep.subr.mxu0 0.0
  %965 = vmatpush1.msra.mxu0 0.0
  %966 = vmatprep.subr.mxu0 0.0
  %967 = vmatpush1.msra.mxu0 0.0
  %968 = vmatprep.subr.mxu0 0.0
  %969 = vmatpush1.msra.mxu0 0.0
  %970 = vmatprep.subr.mxu0 0.0
  %971 = vmatpush1.msra.mxu0 0.0
  %972 = vmatprep.subr.mxu0 0.0
  %973 = vmatpush1.msra.mxu0 0.0
  %974 = vmatprep.subr.mxu0 0.0
  %975 = vmatpush1.msra.mxu0 0.0
  %976 = vmatprep.subr.mxu0 0.0
  %977 = vmatpush1.msra.mxu0 0.0
  %978 = vmatprep.subr.mxu0 0.0
  %979 = vmatpush1.msra.mxu0 0.0
  %980 = vmatprep.subr.mxu0 0.0
  %981 = vmatpush1.msra.mxu0 0.0
  %982 = vmatprep.subr.mxu0 0.0
  %983 = vmatpush1.msra.mxu0 0.0
  %984 = vmatprep.subr.mxu0 0.0
  %985 = vmatpush1.msra.mxu0 0.0
  %986 = vmatprep.subr.mxu0 0.0
  %987 = vmatpush1.msra.mxu0 0.0
  %988 = vmatprep.subr.mxu0 0.0
  %989 = vmatpush1.msra.mxu0 0.0
  %990 = vmatprep.subr.mxu0 0.0
  %991 = vmatpush1.msra.mxu0 0.0
  %992 = vmatprep.subr.mxu0 0.0
  %993 = vmatpush1.msra.mxu0 0.0
  %994 = vmatprep.subr.mxu0 0.0
  %995 = vmatpush1.msra.mxu0 0.0
  %996 = vmatprep.subr.mxu0 0.0
  %997 = vmatpush1.msra.mxu0 0.0
  %998 = vmatprep.subr.mxu0 0.0
  %999 = vmatpush1.msra.mxu0 0.0
  %1000 = vmatprep.subr.mxu0 0.0
  %1001 = vmatpush1.msra.mxu0 0.0
  %1002 = vmatprep.subr.mxu0 0.0
  %1003 = vmatpush1.msra.mxu0 0.0
  %1004 = vmatprep.subr.mxu0 0.0
  %1005 = vmatpush1.msra.mxu0 0.0
  %1006 = vmatprep.subr.mxu0 0.0
  %1007 = vmatpush1.msra.mxu0 0.0
  %1008 = vmatprep.subr.mxu0 0.0
  %1009 = vmatpush1.msra.mxu0 0.0
  %1010 = vmatprep.subr.mxu0 0.0
  %1011 = vmatpush1.msra.mxu0 0.0
  %1012 = vmatprep.subr.mxu0 0.0
  %1013 = vmatpush1.msra.mxu0 0.0
  %1014 = vmatprep.subr.mxu0 0.0
  %1015 = vmatpush1.msra.mxu0 0.0
  %1016 = vmatprep.subr.mxu0 0.0
  %1017 = vmatpush1.msra.mxu0 0.0
  %1018 = vmatprep.subr.mxu0 0.0
  %1019 = vmatpush1.msra.mxu0 0.0
  %1020 = vmatprep.subr.mxu0 0.0
  %1021 = vmatpush1.msra.mxu0 0.0
  %1022 = vmatprep.subr.mxu0 0.0
  %1023 = vmatpush1.msra.mxu0 0.0
  %1024 = vmatprep.mubr.f32.mxu0 0.0
  %1025 = vmatmul.mubr.f32.gmra.mrb[0].mxu0 %v952
  %v1026 = vpop.f32.mrb[0].mxu0
  %v1027 = vadd.f32 0.0, %v1026
  %v1028 = vpop.f32.mrb[0].mxu0
  %1029 = vmatprep.mubr.f32.mxu0 0.0
  %1030 = vmatmul.mubr.f32.gmra.mrb[0].mxu0 %v954
  %v1031 = vpop.f32.mrb[0].mxu0
  %v1032 = vadd.f32 0.0, %v1031
  %v1033 = vpop.f32.mrb[0].mxu0
  %1034 = vmatprep.mubr.f32.mxu0 0.0
  %1035 = vmatmul.mubr.f32.gmra.mrb[0].mxu0 %v956
  %v1036 = vpop.f32.mrb[0].mxu0
  %v1037 = vadd.f32 0.0, %v1036
  %v1038 = vpop.f32.mrb[0].mxu0
  %1039 = vmatprep.mubr.f32.mxu0 0.0
  %1040 = vmatmul.mubr.f32.gmra.mrb[0].mxu0 %v958
  %v1041 = vpop.f32.mrb[0].mxu0
  %v1042 = vadd.f32 0.0, %v1041
  %v1043 = vpop.f32.mrb[0].mxu0
  %1044 = vdwg.mxu0
  %1045 = vrot.lane.b32.xlu0 %v317, 16
  %v1046 = vpop.permute.xlu0 %1045
  %1047 = vrot.lane.b32.xlu0 %v322, 16
  %v1048 = vpop.permute.xlu0 %1047
  %1049 = vrot.lane.b32.xlu0 %v327, 16
  %v1050 = vpop.permute.xlu0 %1049
  %1051 = vrot.lane.b32.xlu0 %v332, 16
  %v1052 = vpop.permute.xlu0 %1051
  %v1053 = vsel %vm341, %v1046, 0
  %v1055 = vsel %vm341, %v1048, 0
  %v1057 = vsel %vm341, %v1050, 0
  %v1059 = vsel %vm341, %v1052, 0
  %1061 = vmatprep.subr.mxu0 0.0
  %1062 = vmatpush1.msra.mxu0 %v339
  %1063 = vmatprep.subr.mxu0 0.0
  %1064 = vmatpush1.msra.mxu0 %v340
  %1065 = vmatprep.subr.mxu0 0.0
  %1066 = vmatpush1.msra.mxu0 0.0
  %1067 = vmatprep.subr.mxu0 0.0
  %1068 = vmatpush1.msra.mxu0 0.0
  %1069 = vmatprep.subr.mxu0 0.0
  %1070 = vmatpush1.msra.mxu0 0.0
  %1071 = vmatprep.subr.mxu0 0.0
  %1072 = vmatpush1.msra.mxu0 0.0
  %1073 = vmatprep.subr.mxu0 0.0
  %1074 = vmatpush1.msra.mxu0 0.0
  %1075 = vmatprep.subr.mxu0 0.0
  %1076 = vmatpush1.msra.mxu0 0.0
  %1077 = vmatprep.subr.mxu0 0.0
  %1078 = vmatpush1.msra.mxu0 0.0
  %1079 = vmatprep.subr.mxu0 0.0
  %1080 = vmatpush1.msra.mxu0 0.0
  %1081 = vmatprep.subr.mxu0 0.0
  %1082 = vmatpush1.msra.mxu0 0.0
  %1083 = vmatprep.subr.mxu0 0.0
  %1084 = vmatpush1.msra.mxu0 0.0
  %1085 = vmatprep.subr.mxu0 0.0
  %1086 = vmatpush1.msra.mxu0 0.0
  %1087 = vmatprep.subr.mxu0 0.0
  %1088 = vmatpush1.msra.mxu0 0.0
  %1089 = vmatprep.subr.mxu0 0.0
  %1090 = vmatpush1.msra.mxu0 0.0
  %1091 = vmatprep.subr.mxu0 0.0
  %1092 = vmatpush1.msra.mxu0 0.0
  %1093 = vmatprep.subr.mxu0 0.0
  %1094 = vmatpush1.msra.mxu0 0.0
  %1095 = vmatprep.subr.mxu0 0.0
  %1096 = vmatpush1.msra.mxu0 0.0
  %1097 = vmatprep.subr.mxu0 0.0
  %1098 = vmatpush1.msra.mxu0 0.0
  %1099 = vmatprep.subr.mxu0 0.0
  %1100 = vmatpush1.msra.mxu0 0.0
  %1101 = vmatprep.subr.mxu0 0.0
  %1102 = vmatpush1.msra.mxu0 0.0
  %1103 = vmatprep.subr.mxu0 0.0
  %1104 = vmatpush1.msra.mxu0 0.0
  %1105 = vmatprep.subr.mxu0 0.0
  %1106 = vmatpush1.msra.mxu0 0.0
  %1107 = vmatprep.subr.mxu0 0.0
  %1108 = vmatpush1.msra.mxu0 0.0
  %1109 = vmatprep.subr.mxu0 0.0
  %1110 = vmatpush1.msra.mxu0 0.0
  %1111 = vmatprep.subr.mxu0 0.0
  %1112 = vmatpush1.msra.mxu0 0.0
  %1113 = vmatprep.subr.mxu0 0.0
  %1114 = vmatpush1.msra.mxu0 0.0
  %1115 = vmatprep.subr.mxu0 0.0
  %1116 = vmatpush1.msra.mxu0 0.0
  %1117 = vmatprep.subr.mxu0 0.0
  %1118 = vmatpush1.msra.mxu0 0.0
  %1119 = vmatprep.subr.mxu0 0.0
  %1120 = vmatpush1.msra.mxu0 0.0
  %1121 = vmatprep.subr.mxu0 0.0
  %1122 = vmatpush1.msra.mxu0 0.0
  %1123 = vmatprep.subr.mxu0 0.0
  %1124 = vmatpush1.msra.mxu0 0.0
  %1125 = vmatprep.mubr.f32.mxu0 0.0
  %1126 = vmatmul.mubr.f32.gmra.mrb[0].mxu0 %v1053
  %v1127 = vpop.f32.mrb[0].mxu0
  %v1128 = vadd.f32 0.0, %v1127
  %v1129 = vpop.f32.mrb[0].mxu0
  %1130 = vmatprep.mubr.f32.mxu0 0.0
  %1131 = vmatmul.mubr.f32.gmra.mrb[0].mxu0 %v1055
  %v1132 = vpop.f32.mrb[0].mxu0
  %v1133 = vadd.f32 0.0, %v1132
  %v1134 = vpop.f32.mrb[0].mxu0
  %1135 = vmatprep.mubr.f32.mxu0 0.0
  %1136 = vmatmul.mubr.f32.gmra.mrb[0].mxu0 %v1057
  %v1137 = vpop.f32.mrb[0].mxu0
  %v1138 = vadd.f32 0.0, %v1137
  %v1139 = vpop.f32.mrb[0].mxu0
  %1140 = vmatprep.mubr.f32.mxu0 0.0
  %1141 = vmatmul.mubr.f32.gmra.mrb[0].mxu0 %v1059
  %v1142 = vpop.f32.mrb[0].mxu0
  %v1143 = vadd.f32 0.0, %v1142
  %v1144 = vpop.f32.mrb[0].mxu0
  %1145 = vdwg.mxu0
  %1150 = vrot.lane.b32.xlu0 %v522, 16
  %v1151 = vpop.permute.xlu0 %1150
  %1152 = vrot.lane.b32.xlu0 %v527, 16
  %v1153 = vpop.permute.xlu0 %1152
  %1154 = vrot.lane.b32.xlu0 %v532, 16
  %v1155 = vpop.permute.xlu0 %1154
  %1156 = vrot.lane.b32.xlu0 %v537, 16
  %v1157 = vpop.permute.xlu0 %1156
  %1166 = vrot.lane.b32.xlu0 %v623, 32
  %v1167 = vpop.permute.xlu0 %1166
  %1168 = vrot.lane.b32.xlu0 %v628, 32
  %v1169 = vpop.permute.xlu0 %1168
  %1170 = vrot.lane.b32.xlu0 %v633, 32
  %v1171 = vpop.permute.xlu0 %1170
  %1172 = vrot.lane.b32.xlu0 %v638, 32
  %v1173 = vpop.permute.xlu0 %1172
  %1182 = vrot.lane.b32.xlu0 %v724, 48
  %v1183 = vpop.permute.xlu0 %1182
  %1184 = vrot.lane.b32.xlu0 %v729, 48
  %v1185 = vpop.permute.xlu0 %1184
  %1186 = vrot.lane.b32.xlu0 %v734, 48
  %v1187 = vpop.permute.xlu0 %1186
  %1188 = vrot.lane.b32.xlu0 %v739, 48
  %v1189 = vpop.permute.xlu0 %1188
  %1198 = vrot.lane.b32.xlu0 %v825, 64
  %v1199 = vpop.permute.xlu0 %1198
  %1200 = vrot.lane.b32.xlu0 %v830, 64
  %v1201 = vpop.permute.xlu0 %1200
  %1202 = vrot.lane.b32.xlu0 %v835, 64
  %v1203 = vpop.permute.xlu0 %1202
  %1204 = vrot.lane.b32.xlu0 %v840, 64
  %v1205 = vpop.permute.xlu0 %1204
  %1214 = vrot.lane.b32.xlu0 %v926, 80
  %v1215 = vpop.permute.xlu0 %1214
  %1216 = vrot.lane.b32.xlu0 %v931, 80
  %v1217 = vpop.permute.xlu0 %1216
  %1218 = vrot.lane.b32.xlu0 %v936, 80
  %v1219 = vpop.permute.xlu0 %1218
  %1220 = vrot.lane.b32.xlu0 %v941, 80
  %v1221 = vpop.permute.xlu0 %1220
  %1230 = vrot.lane.b32.xlu0 %v1027, 96
  %v1231 = vpop.permute.xlu0 %1230
  %1232 = vrot.lane.b32.xlu0 %v1032, 96
  %v1233 = vpop.permute.xlu0 %1232
  %1234 = vrot.lane.b32.xlu0 %v1037, 96
  %v1235 = vpop.permute.xlu0 %1234
  %1236 = vrot.lane.b32.xlu0 %v1042, 96
  %v1237 = vpop.permute.xlu0 %1236
  %1246 = vrot.lane.b32.xlu0 %v1128, 112
  %v1247 = vpop.permute.xlu0 %1246
  %1248 = vrot.lane.b32.xlu0 %v1133, 112
  %v1249 = vpop.permute.xlu0 %1248
  %1250 = vrot.lane.b32.xlu0 %v1138, 112
  %v1251 = vpop.permute.xlu0 %1250
  %1252 = vrot.lane.b32.xlu0 %v1143, 112
  %v1253 = vpop.permute.xlu0 %1252
  %v1258 = vsel %vm341, %v421, %v1151
  %v1259 = vsel %vm341, %v426, %v1153
  %v1260 = vsel %vm341, %v431, %v1155
  %v1261 = vsel %vm341, %v436, %v1157
  %v1262 = vsel %vm107, %v1258, %v1167
  %v1263 = vsel %vm107, %v1259, %v1169
  %v1264 = vsel %vm107, %v1260, %v1171
  %v1265 = vsel %vm107, %v1261, %v1173
  %vm1266 = vcmask 392192
  %v1267 = vsel %vm1266, %v1262, %v1183
  %v1268 = vsel %vm1266, %v1263, %v1185
  %v1269 = vsel %vm1266, %v1264, %v1187
  %v1270 = vsel %vm1266, %v1265, %v1189
  %vm1271 = vcmask 523264
  %v1272 = vsel %vm1271, %v1267, %v1199
  %v1273 = vsel %vm1271, %v1268, %v1201
  %v1274 = vsel %vm1271, %v1269, %v1203
  %v1275 = vsel %vm1271, %v1270, %v1205
  %vm1276 = vcmask 654336
  %v1277 = vsel %vm1276, %v1272, %v1215
  %v1278 = vsel %vm1276, %v1273, %v1217
  %v1279 = vsel %vm1276, %v1274, %v1219
  %v1280 = vsel %vm1276, %v1275, %v1221
  %vm1281 = vcmask 785408
  %v1282 = vsel %vm1281, %v1277, %v1231
  %v1283 = vsel %vm1281, %v1278, %v1233
  %v1284 = vsel %vm1281, %v1279, %v1235
  %v1285 = vsel %vm1281, %v1280, %v1237
  %vm1286 = vcmask 916480
  %v1287 = vsel %vm1286, %v1282, %v1247
  %v1288 = vsel %vm1286, %v1283, %v1249
  %v1289 = vsel %vm1286, %v1284, %v1251
  %v1290 = vsel %vm1286, %v1285, %v1253
  %1291 = vst [vmem:[%s6] sm:$0xff] %v1287
  %1292 = vst [vmem:[%s6 + $0x8] sm:$0xff] %v1288
  %1293 = vst [vmem:[%s6 + $0x10] sm:$0xff] %v1289
  %1294 = vst [vmem:[%s6 + $0x18] sm:$0xff] %v1290
  %s1295 = scalar_lea.vmem %s2, 64
  %v1296 = vld [vmem:[%s1295] sm:$0xff]
  %v1297 = vld [vmem:[%s1295 + $0x8] sm:$0xff]
  %v1298 = vld [vmem:[%s1295 + $0x10] sm:$0xff]
  %v1299 = vld [vmem:[%s1295 + $0x18] sm:$0xff]
  %v1300 = vld [vmem:[%s3] sm:$0xff]
  %v1301 = vld [vmem:[%s3 + $0x8] sm:$0xff]
  %v1302 = vld [vmem:[%s3 + $0x10] sm:$0xff]
  %v1303 = vld [vmem:[%s3 + $0x18] sm:$0xff]
  %1305 = vset.pattern.permute.xlu0 4
  %1306 = vperm.xlu0 %1305, %v1300
  %v1307 = vpop.permute.xlu0 %1306
  %1310 = vset.pattern.permute.xlu0 4
  %1311 = vperm.xlu0 %1310, %v1301
  %v1312 = vpop.permute.xlu0 %1311
  %1315 = vset.pattern.permute.xlu0 4
  %1316 = vperm.xlu0 %1315, %v1302
  %v1317 = vpop.permute.xlu0 %1316
  %1320 = vset.pattern.permute.xlu0 4
  %1321 = vperm.xlu0 %1320, %v1303
  %v1322 = vpop.permute.xlu0 %1321
  %v1325 = vsel %vm107, %v1296, 0
  %v1328 = vsel %vm107, %v1297, 0
  %v1331 = vsel %vm107, %v1298, 0
  %v1334 = vsel %vm107, %v1299, 0
  %1336 = vmatprep.subr.mxu0 0.0
  %1337 = vmatpush1.msra.mxu0 %v1287
  %1338 = vmatprep.subr.mxu0 0.0
  %1339 = vmatpush1.msra.mxu0 %v1288
  %1340 = vmatprep.subr.mxu0 0.0
  %1341 = vmatpush1.msra.mxu0 %v1289
  %1342 = vmatprep.subr.mxu0 0.0
  %1343 = vmatpush1.msra.mxu0 %v1290
  %1344 = vmatprep.subr.mxu0 0.0
  %1345 = vmatpush1.msra.mxu0 0.0
  %1346 = vmatprep.subr.mxu0 0.0
  %1347 = vmatpush1.msra.mxu0 0.0
  %1348 = vmatprep.subr.mxu0 0.0
  %1349 = vmatpush1.msra.mxu0 0.0
  %1350 = vmatprep.subr.mxu0 0.0
  %1351 = vmatpush1.msra.mxu0 0.0
  %1352 = vmatprep.subr.mxu0 0.0
  %1353 = vmatpush1.msra.mxu0 0.0
  %1354 = vmatprep.subr.mxu0 0.0
  %1355 = vmatpush1.msra.mxu0 0.0
  %1356 = vmatprep.subr.mxu0 0.0
  %1357 = vmatpush1.msra.mxu0 0.0
  %1358 = vmatprep.subr.mxu0 0.0
  %1359 = vmatpush1.msra.mxu0 0.0
  %1360 = vmatprep.subr.mxu0 0.0
  %1361 = vmatpush1.msra.mxu0 0.0
  %1362 = vmatprep.subr.mxu0 0.0
  %1363 = vmatpush1.msra.mxu0 0.0
  %1364 = vmatprep.subr.mxu0 0.0
  %1365 = vmatpush1.msra.mxu0 0.0
  %1366 = vmatprep.subr.mxu0 0.0
  %1367 = vmatpush1.msra.mxu0 0.0
  %1368 = vmatprep.subr.mxu0 0.0
  %1369 = vmatpush1.msra.mxu0 0.0
  %1370 = vmatprep.subr.mxu0 0.0
  %1371 = vmatpush1.msra.mxu0 0.0
  %1372 = vmatprep.subr.mxu0 0.0
  %1373 = vmatpush1.msra.mxu0 0.0
  %1374 = vmatprep.subr.mxu0 0.0
  %1375 = vmatpush1.msra.mxu0 0.0
  %1376 = vmatprep.subr.mxu0 0.0
  %1377 = vmatpush1.msra.mxu0 0.0
  %1378 = vmatprep.subr.mxu0 0.0
  %1379 = vmatpush1.msra.mxu0 0.0
  %1380 = vmatprep.subr.mxu0 0.0
  %1381 = vmatpush1.msra.mxu0 0.0
  %1382 = vmatprep.subr.mxu0 0.0
  %1383 = vmatpush1.msra.mxu0 0.0
  %1384 = vmatprep.subr.mxu0 0.0
  %1385 = vmatpush1.msra.mxu0 0.0
  %1386 = vmatprep.subr.mxu0 0.0
  %1387 = vmatpush1.msra.mxu0 0.0
  %1388 = vmatprep.subr.mxu0 0.0
  %1389 = vmatpush1.msra.mxu0 0.0
  %1390 = vmatprep.subr.mxu0 0.0
  %1391 = vmatpush1.msra.mxu0 0.0
  %1392 = vmatprep.subr.mxu0 0.0
  %1393 = vmatpush1.msra.mxu0 0.0
  %1394 = vmatprep.subr.mxu0 0.0
  %1395 = vmatpush1.msra.mxu0 0.0
  %1396 = vmatprep.subr.mxu0 0.0
  %1397 = vmatpush1.msra.mxu0 0.0
  %1398 = vmatprep.subr.mxu0 0.0
  %1399 = vmatpush1.msra.mxu0 0.0
  %1400 = vmatprep.mubr.f32.mxu0 0.0
  %1401 = vmatmul.mubr.f32.gmra.mrb[0].mxu0 %v1325
  %v1402 = vpop.f32.mrb[0].mxu0
  %v1403 = vadd.f32 %v1307, %v1402
  %v1404 = vpop.f32.mrb[0].mxu0
  %1405 = vmatprep.mubr.f32.mxu0 0.0
  %1406 = vmatmul.mubr.f32.gmra.mrb[0].mxu0 %v1328
  %v1407 = vpop.f32.mrb[0].mxu0
  %v1408 = vadd.f32 %v1312, %v1407
  %v1409 = vpop.f32.mrb[0].mxu0
  %1410 = vmatprep.mubr.f32.mxu0 0.0
  %1411 = vmatmul.mubr.f32.gmra.mrb[0].mxu0 %v1331
  %v1412 = vpop.f32.mrb[0].mxu0
  %v1413 = vadd.f32 %v1317, %v1412
  %v1414 = vpop.f32.mrb[0].mxu0
  %1415 = vmatprep.mubr.f32.mxu0 0.0
  %1416 = vmatmul.mubr.f32.gmra.mrb[0].mxu0 %v1334
  %v1417 = vpop.f32.mrb[0].mxu0
  %v1418 = vadd.f32 %v1322, %v1417
  %v1419 = vpop.f32.mrb[0].mxu0
  %1420 = vdwg.mxu0
  %vm1421 = vcmp.ge.f32.partialorder %v1403, 0.0
  %vm1422 = vcmp.ge.f32.partialorder %v1408, 0.0
  %vm1423 = vcmp.ge.f32.partialorder %v1413, 0.0
  %vm1424 = vcmp.ge.f32.partialorder %v1418, 0.0
  %v1425 = vmul.f32 %v1403, 0.05
  %v1426 = vmul.f32 %v1408, 0.05
  %v1427 = vmul.f32 %v1413, 0.05
  %v1428 = vmul.f32 %v1418, 0.05
  %v1429 = vsel %vm1421, %v1403, %v1425
  %v1430 = vsel %vm1422, %v1408, %v1426
  %v1431 = vsel %vm1423, %v1413, %v1427
  %v1432 = vsel %vm1424, %v1418, %v1428
  %s1433 = scalar_lea.vmem %s2, 96
  %v1434 = vld [vmem:[%s1433] sm:$0xff]
  %v1435 = vld [vmem:[%s1433 + $0x8] sm:$0xff]
  %v1436 = vld [vmem:[%s1433 + $0x10] sm:$0xff]
  %v1437 = vld [vmem:[%s1433 + $0x18] sm:$0xff]
  %1438 = vset.pattern.permute.xlu0 5
  %1439 = vperm.xlu0 %1438, %v1300
  %v1440 = vpop.permute.xlu0 %1439
  %1442 = vset.pattern.permute.xlu0 5
  %1443 = vperm.xlu0 %1442, %v1301
  %v1444 = vpop.permute.xlu0 %1443
  %1446 = vset.pattern.permute.xlu0 5
  %1447 = vperm.xlu0 %1446, %v1302
  %v1448 = vpop.permute.xlu0 %1447
  %1450 = vset.pattern.permute.xlu0 5
  %1451 = vperm.xlu0 %1450, %v1303
  %v1452 = vpop.permute.xlu0 %1451
  %v1455 = vsel %vm107, %v1434, 0
  %v1458 = vsel %vm107, %v1435, 0
  %v1461 = vsel %vm107, %v1436, 0
  %v1464 = vsel %vm107, %v1437, 0
  %1466 = vmatprep.subr.mxu0 0.0
  %1467 = vmatpush1.msra.mxu0 %v1429
  %1468 = vmatprep.subr.mxu0 0.0
  %1469 = vmatpush1.msra.mxu0 %v1430
  %1470 = vmatprep.subr.mxu0 0.0
  %1471 = vmatpush1.msra.mxu0 %v1431
  %1472 = vmatprep.subr.mxu0 0.0
  %1473 = vmatpush1.msra.mxu0 %v1432
  %1474 = vmatprep.subr.mxu0 0.0
  %1475 = vmatpush1.msra.mxu0 0.0
  %1476 = vmatprep.subr.mxu0 0.0
  %1477 = vmatpush1.msra.mxu0 0.0
  %1478 = vmatprep.subr.mxu0 0.0
  %1479 = vmatpush1.msra.mxu0 0.0
  %1480 = vmatprep.subr.mxu0 0.0
  %1481 = vmatpush1.msra.mxu0 0.0
  %1482 = vmatprep.subr.mxu0 0.0
  %1483 = vmatpush1.msra.mxu0 0.0
  %1484 = vmatprep.subr.mxu0 0.0
  %1485 = vmatpush1.msra.mxu0 0.0
  %1486 = vmatprep.subr.mxu0 0.0
  %1487 = vmatpush1.msra.mxu0 0.0
  %1488 = vmatprep.subr.mxu0 0.0
  %1489 = vmatpush1.msra.mxu0 0.0
  %1490 = vmatprep.subr.mxu0 0.0
  %1491 = vmatpush1.msra.mxu0 0.0
  %1492 = vmatprep.subr.mxu0 0.0
  %1493 = vmatpush1.msra.mxu0 0.0
  %1494 = vmatprep.subr.mxu0 0.0
  %1495 = vmatpush1.msra.mxu0 0.0
  %1496 = vmatprep.subr.mxu0 0.0
  %1497 = vmatpush1.msra.mxu0 0.0
  %1498 = vmatprep.subr.mxu0 0.0
  %1499 = vmatpush1.msra.mxu0 0.0
  %1500 = vmatprep.subr.mxu0 0.0
  %1501 = vmatpush1.msra.mxu0 0.0
  %1502 = vmatprep.subr.mxu0 0.0
  %1503 = vmatpush1.msra.mxu0 0.0
  %1504 = vmatprep.subr.mxu0 0.0
  %1505 = vmatpush1.msra.mxu0 0.0
  %1506 = vmatprep.subr.mxu0 0.0
  %1507 = vmatpush1.msra.mxu0 0.0
  %1508 = vmatprep.subr.mxu0 0.0
  %1509 = vmatpush1.msra.mxu0 0.0
  %1510 = vmatprep.subr.mxu0 0.0
  %1511 = vmatpush1.msra.mxu0 0.0
  %1512 = vmatprep.subr.mxu0 0.0
  %1513 = vmatpush1.msra.mxu0 0.0
  %1514 = vmatprep.subr.mxu0 0.0
  %1515 = vmatpush1.msra.mxu0 0.0
  %1516 = vmatprep.subr.mxu0 0.0
  %1517 = vmatpush1.msra.mxu0 0.0
  %1518 = vmatprep.subr.mxu0 0.0
  %1519 = vmatpush1.msra.mxu0 0.0
  %1520 = vmatprep.subr.mxu0 0.0
  %1521 = vmatpush1.msra.mxu0 0.0
  %1522 = vmatprep.subr.mxu0 0.0
  %1523 = vmatpush1.msra.mxu0 0.0
  %1524 = vmatprep.subr.mxu0 0.0
  %1525 = vmatpush1.msra.mxu0 0.0
  %1526 = vmatprep.subr.mxu0 0.0
  %1527 = vmatpush1.msra.mxu0 0.0
  %1528 = vmatprep.subr.mxu0 0.0
  %1529 = vmatpush1.msra.mxu0 0.0
  %1530 = vmatprep.mubr.f32.mxu0 0.0
  %1531 = vmatmul.mubr.f32.gmra.mrb[0].mxu0 %v1455
  %v1532 = vpop.f32.mrb[0].mxu0
  %v1533 = vadd.f32 %v1440, %v1532
  %v1534 = vpop.f32.mrb[0].mxu0
  %1535 = vmatprep.mubr.f32.mxu0 0.0
  %1536 = vmatmul.mubr.f32.gmra.mrb[0].mxu0 %v1458
  %v1537 = vpop.f32.mrb[0].mxu0
  %v1538 = vadd.f32 %v1444, %v1537
  %v1539 = vpop.f32.mrb[0].mxu0
  %1540 = vmatprep.mubr.f32.mxu0 0.0
  %1541 = vmatmul.mubr.f32.gmra.mrb[0].mxu0 %v1461
  %v1542 = vpop.f32.mrb[0].mxu0
  %v1543 = vadd.f32 %v1448, %v1542
  %v1544 = vpop.f32.mrb[0].mxu0
  %1545 = vmatprep.mubr.f32.mxu0 0.0
  %1546 = vmatmul.mubr.f32.gmra.mrb[0].mxu0 %v1464
  %v1547 = vpop.f32.mrb[0].mxu0
  %v1548 = vadd.f32 %v1452, %v1547
  %v1549 = vpop.f32.mrb[0].mxu0
  %1550 = vdwg.mxu0
  %vm1551 = vcmp.ge.f32.partialorder %v1533, 0.0
  %vm1552 = vcmp.ge.f32.partialorder %v1538, 0.0
  %vm1553 = vcmp.ge.f32.partialorder %v1543, 0.0
  %vm1554 = vcmp.ge.f32.partialorder %v1548, 0.0
  %v1555 = vmul.f32 %v1533, 0.05
  %v1556 = vmul.f32 %v1538, 0.05
  %v1557 = vmul.f32 %v1543, 0.05
  %v1558 = vmul.f32 %v1548, 0.05
  %v1559 = vsel %vm1551, %v1533, %v1555
  %v1560 = vsel %vm1552, %v1538, %v1556
  %v1561 = vsel %vm1553, %v1543, %v1557
  %v1562 = vsel %vm1554, %v1548, %v1558
  %v1563 = vld [vmem:[%s3] sm:$0x1]
  %1564 = vset.pattern.permute.xlu0 6
  %1565 = vperm.xlu0 %1564, %v1300
  %v1566 = vpop.permute.xlu0 %1565
  %1568 = vset.pattern.permute.xlu0 6
  %1569 = vperm.xlu0 %1568, %v1301
  %v1570 = vpop.permute.xlu0 %1569
  %1572 = vset.pattern.permute.xlu0 6
  %1573 = vperm.xlu0 %1572, %v1302
  %v1574 = vpop.permute.xlu0 %1573
  %1576 = vset.pattern.permute.xlu0 6
  %1577 = vperm.xlu0 %1576, %v1303
  %v1578 = vpop.permute.xlu0 %1577
  %v1580 = vmul.f32 %v1566, %v1559
  %v1581 = vmul.f32 %v1570, %v1560
  %v1582 = vmul.f32 %v1574, %v1561
  %v1583 = vmul.f32 %v1578, %v1562
  %v1584 = vadd.f32 %v1580, %v1581
  %v1585 = vadd.f32 %v1584, %v1582
  %v1586 = vadd.f32 %v1585, %v1583
  %v1587 = vrot.slane %v1586, 4
  %v1588 = vadd.f32 %v1586, %v1587
  %v1589 = vrot.slane %v1588, 2
  %v1590 = vadd.f32 %v1588, %v1589
  %v1591 = vrot.slane %v1590, 1
  %v1592 = vadd.f32 %v1590, %v1591
  %1594 = vset.pattern.permute.xlu0 7
  %1595 = vperm.xlu0 %1594, %v1563
  %v1596 = vpop.permute.xlu0 %1595
  %v1598 = vadd.f32 %v1592, %v1596
  %1599 = vst [vmem:[%s4] sm:$0x1] %v1598
  // Predicated region
  $region18: #{gae_forward.1} parent=0 // pred_check
    _
  $region19: #{gae_forward.1} parent=0 // pred_check_branch
    %1601 = sbr.rel (0) target = $region21
  $region20: #{gae_forward.1} parent=0 // pred_region
    _
  $region21: #{gae_forward.1} parent=0 // pred_fallthru
    _
  // Predicated region
  $region22: #{gae_forward.1} parent=0 // pred_check
    _
  $region23: #{gae_forward.1} parent=0 // pred_check_branch
    %1603 = sbr.rel (0) target = $region25
  $region24: #{gae_forward.1} parent=0 // pred_region
    _
  $region25: #{gae_forward.1} parent=0 // pred_fallthru
    _
  // Predicated region
  $region26: #{gae_forward.1} parent=0 // pred_check
    _
  $region27: #{gae_forward.1} parent=0 // pred_check_branch
    %1605 = sbr.rel (0) target = $region29
  $region28: #{gae_forward.1} parent=0 // pred_region
    _
  $region29: #{gae_forward.1} parent=0 // pred_fallthru
    _
  // Predicated region
  $region30: #{gae_forward.1} parent=0 // pred_check
    _
  $region31: #{gae_forward.1} parent=0 // pred_check_branch
    %1607 = sbr.rel (0) target = $region33
  $region32: #{gae_forward.1} parent=0 // pred_region
    _
  $region33: #{gae_forward.1} parent=0 // pred_fallthru
    _
  // Predicated region
  $region34: #{gae_forward.1} parent=0 // pred_check
    _
  $region35: #{gae_forward.1} parent=0 // pred_check_branch
    %1609 = sbr.rel (0) target = $region37
  $region36: #{gae_forward.1} parent=0 // pred_region
    _
  $region37: #{gae_forward.1} parent=0 // pred_fallthru
    _
  // Predicated region
  $region38: #{gae_forward.1} parent=0 // pred_check
    _
  $region39: #{gae_forward.1} parent=0 // pred_check_branch
    %1611 = sbr.rel (0) target = $region41
  $region40: #{gae_forward.1} parent=0 // pred_region
    _
  $region41: #{gae_forward.1} parent=0 // pred_fallthru
    _

</llo_original>
